<compile_context>
chip_gen: v5e
topology: v5e:2x2
jax: 0.10.0
libtpu: 0.0.40
codegen_flags: <defaults>
</compile_context>

<pallas_src>
import functools

import jax
import jax.numpy as jnp
from jax import lax
from jax.experimental import pallas as pl
from jax.experimental.pallas import tpu as pltpu


def _round_up(x, m):
    return (x + m - 1) // m * m


def _gate_dims(hidden_dim):
    """Lane layout for the fused [n | r | z] gate tile.

    If all three gates fit in one 128-lane tile we pack them tightly
    (gate stride = H); otherwise each gate gets its own 128-lane-aligned slot.
    Returns (gate_stride, gate_lanes, hidden_lanes)."""
    if 3 * hidden_dim <= 128:
        gate_stride = hidden_dim
        gate_lanes = 128
    else:
        gate_stride = _round_up(hidden_dim, 128)
        gate_lanes = 3 * gate_stride
    hidden_lanes = _round_up(hidden_dim, 128)
    return gate_stride, gate_lanes, hidden_lanes


def _rot_lanes_down(x, k):
    """Circular rotation toward lower lane indices by k (== jnp.roll(x, -k, axis=-1)).

    Implemented as a lane-aligned self-concat + static slice so the lowering only
    needs aligned concatenation and an (unaligned) static lane slice."""
    g = x.shape[-1]
    k = k % g
    if k == 0:
        return x
    xx = jnp.concatenate([x, x], axis=-1)
    return lax.slice_in_dim(xx, k, k + g, axis=x.ndim - 1)


# ----------------------------------------------------------------------------
# Fused two-tower GRU kernel.
#
# PyTorch nn.GRU cell:
#   r  = sigmoid(x W_ir + b_ir + h W_hr + b_hr)
#   z  = sigmoid(x W_iz + b_iz + h W_hz + b_hz)
#   n  = tanh   (x W_in + b_in + r * (h W_hn + b_hn))
#   h' = (1 - z) * n + z * h
#
# Kernel lane packing (slot order [n, r, z], stride GS):
#   gi/gh lanes [0:H]        -> n-side pre-activations
#   gi/gh lanes [GS:GS+H]    -> r-side pre-activations
#   gi/gh lanes [2GS:2GS+H]  -> z-side pre-activations
# h lives in lanes [0:H] of a 128-lane tile (W_hh rows beyond H are zero, so junk
# in the dead lanes can never leak into the live computation).
#
# Grid: (encoder, time_chunk).  h is carried across the time_chunk axis in the
# resident output block; it is (re)zeroed at chunk 0 of each encoder.
# ----------------------------------------------------------------------------
def _two_tower_gru_kernel(x_ref, wih_ref, whh_ref, bih_ref, bhh_ref, h_ref, gi_ref,
                          *, chunk, batch_pad, gate_stride, hidden_lanes,
                          seq_lens, unroll):
    enc = pl.program_id(0)          # 0 = query tower, 1 = document tower
    c = pl.program_id(1)            # time chunk (recurrence carried across this axis)
    Bp, GS, HL = batch_pad, gate_stride, hidden_lanes

    @pl.when(c == 0)
    def _():
        h_ref[...] = jnp.zeros_like(h_ref)

    # Hoisted input-side projections for every timestep of this chunk:
    # one big (chunk*Bp, E) @ (E, G) MXU matmul, off the serial recurrence path.
    gi_ref[...] = (
        jnp.dot(x_ref[...], wih_ref[...], preferred_element_type=jnp.float32)
        + bih_ref[...])

    whh = whh_ref[...]
    bhh = bhh_ref[...]
    # Static per-encoder sequence length (query may be shorter than the padded time axis).
    seq_len = jnp.int32(seq_lens[0]) + enc * jnp.int32(seq_lens[1] - seq_lens[0])
    t0 = c * chunk

    def step(t, h):
        row = pl.multiple_of(t * Bp, Bp)                                 # Bp % 8 == 0
        gi = gi_ref[pl.ds(row, Bp), :]                                   # (Bp, G)
        gh = jnp.dot(h, whh, preferred_element_type=jnp.float32) + bhh   # (Bp, G)
        s = jax.nn.sigmoid(gi + gh)        # r @ [GS:GS+H], z @ [2GS:2GS+H]
        s_r = _rot_lanes_down(s, GS)       # r -> lanes [0:H]
        n = jnp.tanh(gi + s_r * gh)        # lanes [0:H]: tanh(i_n + r*(h W_hn + b_hn))
        s_z = _rot_lanes_down(s_r, GS)     # z -> lanes [0:H]
        z = s_z[:, :HL]
        h_cand = (1.0 - z) * n[:, :HL] + z * h
        # Freeze h once past this encoder's true sequence length (handles the
        # query being shorter than the padded/chunked time axis).
        m = ((t0 + t) < seq_len).astype(jnp.float32)
        return m * h_cand + (1.0 - m) * h

    h_ref[...] = lax.fori_loop(0, chunk, step, h_ref[...], unroll=unroll)


def _encode_towers(x_tm, w_ih, w_hh, b_ih, b_hh, *, seq_lens, chunk, n_chunks,
                   batch_pad, hidden_dim):
    """Single pallas_call encoding both towers.

    x_tm : (2, n_chunks*chunk*batch_pad, E) time-major flattened embedded tokens.
    Returns (2, batch_pad, hidden_lanes) float32 final hidden states."""
    n_enc, _, emb_dim = x_tm.shape
    GS, G, HL = _gate_dims(hidden_dim)
    CB = chunk * batch_pad

    kernel = functools.partial(
        _two_tower_gru_kernel, chunk=chunk, batch_pad=batch_pad,
        gate_stride=GS, hidden_lanes=HL, seq_lens=seq_lens,
        unroll=min(8, chunk))

    return pl.pallas_call(
        kernel,
        out_shape=jax.ShapeDtypeStruct((n_enc, batch_pad, HL), jnp.float32),
        grid_spec=pltpu.PrefetchScalarGridSpec(
            num_scalar_prefetch=0,
            grid=(n_enc, n_chunks),
            in_specs=[
                # per-encoder, per-chunk slab of embedded tokens
                pl.BlockSpec((None, CB, emb_dim), lambda e, c: (e, c, 0)),
                # per-encoder fused weights / biases (resident across the chunk axis)
                pl.BlockSpec((None, emb_dim, G), lambda e, c: (e, 0, 0)),
                pl.BlockSpec((None, HL, G), lambda e, c: (e, 0, 0)),
                pl.BlockSpec((None, 1, G), lambda e, c: (e, 0, 0)),
                pl.BlockSpec((None, 1, G), lambda e, c: (e, 0, 0)),
            ],
            # hidden-state carry: same block across the chunk axis, one block per encoder
            out_specs=pl.BlockSpec((None, batch_pad, HL), lambda e, c: (e, 0, 0)),
            scratch_shapes=[pltpu.VMEM((CB, G), jnp.float32)],  # per-chunk x-side pre-acts
        ),
        compiler_params=pltpu.CompilerParams(
            dimension_semantics=("parallel", "arbitrary")),
    )(x_tm, w_ih, w_hh, b_ih, b_hh)


# ----------------------------------------------------------------------------
# Parameter construction (deterministic, PyTorch-like init) + packed layout
# ----------------------------------------------------------------------------
def _init_gru_params(key, embedding_dim, hidden_dim):
    """nn.GRU uniform(-1/sqrt(H), 1/sqrt(H)) init, repacked into the fused,
    lane-packed kernel layout (slot order [n, r, z], stride GS)."""
    H, E = hidden_dim, embedding_dim
    GS, G, HL = _gate_dims(H)
    k = 1.0 / jnp.sqrt(jnp.float32(H))
    k1, k2, k3, k4 = jax.random.split(key, 4)
    w_ih = jax.random.uniform(k1, (3 * H, E), jnp.float32, -k, k)   # torch rows: [r, z, n]
    w_hh = jax.random.uniform(k2, (3 * H, H), jnp.float32, -k, k)
    b_ih = jax.random.uniform(k3, (3 * H,), jnp.float32, -k, k)
    b_hh = jax.random.uniform(k4, (3 * H,), jnp.float32, -k, k)

    w_ih_p = jnp.zeros((E, G), jnp.float32)
    w_hh_p = jnp.zeros((HL, G), jnp.float32)
    b_ih_p = jnp.zeros((1, G), jnp.float32)
    b_hh_p = jnp.zeros((1, G), jnp.float32)
    for slot, torch_gate in enumerate((2, 0, 1)):       # slot0=n, slot1=r, slot2=z
        src = slice(torch_gate * H, (torch_gate + 1) * H)
        dst = slice(slot * GS, slot * GS + H)
        w_ih_p = w_ih_p.at[:, dst].set(w_ih[src, :].T)
        w_hh_p = w_hh_p.at[:H, dst].set(w_hh[src, :].T)
        b_ih_p = b_ih_p.at[0, dst].set(b_ih[src])
        b_hh_p = b_hh_p.at[0, dst].set(b_hh[src])
    return dict(w_ih=w_ih_p, w_hh=w_hh_p, b_ih=b_ih_p, b_hh=b_hh_p)


def make_two_tower_params(key, vocab_size, embedding_dim, hidden_dim):
    ke, kq, kd = jax.random.split(key, 3)
    embedding = jax.random.normal(ke, (vocab_size, embedding_dim), jnp.float32)
    q = _init_gru_params(kq, embedding_dim, hidden_dim)
    d = _init_gru_params(kd, embedding_dim, hidden_dim)
    stacked = {name: jnp.stack([q[name], d[name]], axis=0) for name in q}
    return dict(embedding=embedding, **stacked)


# ----------------------------------------------------------------------------
# Forward pass (== TwoTowerModel.forward, eval mode)
# ----------------------------------------------------------------------------
@functools.partial(jax.jit, static_argnums=(4, 5))
def two_tower_forward(params, query_ids, pos_doc_ids, neg_doc_ids, hidden_dim, chunk=64):
    emb = params["embedding"]
    B, Tq = query_ids.shape
    _, Td = pos_doc_ids.shape
    n_chunks = pl.cdiv(max(Tq, Td), chunk)
    t_pad = n_chunks * chunk
    batch_pad = _round_up(2 * B, 8)              # doc tower carries pos+neg (2B rows)

    def pad_ids(ids):
        b, t = ids.shape
        return jnp.pad(ids, ((0, batch_pad - b), (0, t_pad - t)))

    # pos/neg documents share the document encoder -> one batch for tower 1
    doc_ids = jnp.concatenate([pos_doc_ids, neg_doc_ids], axis=0)
    ids = jnp.stack([pad_ids(query_ids), pad_ids(doc_ids)], axis=0)      # (2, Bp, Tpad)
    # time-major flatten BEFORE the gather so the embedded rows land in kernel layout
    ids_tm = jnp.transpose(ids, (0, 2, 1)).reshape(2, t_pad * batch_pad)
    x_tm = jnp.take(emb, ids_tm, axis=0)                                 # (2, Tpad*Bp, E)
    # TODO(synk): in-kernel embedding gather (scalar-prefetched ids) would remove this
    # HBM round trip of x_tm; kept as XLA glue for lowering robustness.

    h = _encode_towers(x_tm, params["w_ih"], params["w_hh"],
                       params["b_ih"], params["b_hh"],
                       seq_lens=(Tq, Td), chunk=chunk, n_chunks=n_chunks,
                       batch_pad=batch_pad, hidden_dim=hidden_dim)       # (2, Bp, HL)

    # nn.Dropout is identity at eval time.
    q_vec = h[0, :B, :hidden_dim]
    p_vec = h[1, :B, :hidden_dim]
    n_vec = h[1, B:2 * B, :hidden_dim]
    return q_vec, p_vec, n_vec


# ----------------------------------------------------------------------------
# Pure-JAX reference (lax.scan GRU on the unpacked per-gate weights)
# ----------------------------------------------------------------------------
def _gru_ref(x_emb_bte, w_ih_p, w_hh_p, b_ih_p, b_hh_p, hidden_dim):
    H = hidden_dim
    GS, _, _ = _gate_dims(H)

    def gate(slot):
        s0 = slot * GS
        return (w_ih_p[:, s0:s0 + H], w_hh_p[:H, s0:s0 + H],
                b_ih_p[0, s0:s0 + H], b_hh_p[0, s0:s0 + H])

    wi_n, wh_n, bi_n, bh_n = gate(0)
    wi_r, wh_r, bi_r, bh_r = gate(1)
    wi_z, wh_z, bi_z, bh_z = gate(2)

    def step(h, x_t):
        r = jax.nn.sigmoid(x_t @ wi_r + bi_r + h @ wh_r + bh_r)
        z = jax.nn.sigmoid(x_t @ wi_z + bi_z + h @ wh_z + bh_z)
        n = jnp.tanh(x_t @ wi_n + bi_n + r * (h @ wh_n + bh_n))
        return (1.0 - z) * n + z * h, None

    h0 = jnp.zeros((x_emb_bte.shape[0], H), jnp.float32)
    h_last, _ = lax.scan(step, h0, jnp.transpose(x_emb_bte, (1, 0, 2)))
    return h_last


def _encode_ref(token_ids, embedding, params, enc, hidden_dim):
    x = jnp.take(embedding, token_ids, axis=0)
    return _gru_ref(x, params["w_ih"][enc], params["w_hh"][enc],
                    params["b_ih"][enc], params["b_hh"][enc], hidden_dim)


# ----------------------------------------------------------------------------
if __name__ == "__main__":
    VOCAB = 100
    EMB_DIM = 32
    HIDDEN = 32
    BATCH = 2
    Q_LEN = 8
    D_LEN = 12
    CHUNK = 8          # small chunk so the demo exercises the multi-chunk carry path

    root = jax.random.PRNGKey(0)
    k_params, k_q, k_p, k_n = jax.random.split(root, 4)

    params = make_two_tower_params(k_params, VOCAB, EMB_DIM, HIDDEN)

    query_ids = jax.random.randint(k_q, (BATCH, Q_LEN), 0, VOCAB, dtype=jnp.int32)
    pos_ids = jax.random.randint(k_p, (BATCH, D_LEN), 0, VOCAB, dtype=jnp.int32)
    neg_ids = jax.random.randint(k_n, (BATCH, D_LEN), 0, VOCAB, dtype=jnp.int32)

    q_vec, p_vec, n_vec = two_tower_forward(params, query_ids, pos_ids, neg_ids,
                                            HIDDEN, CHUNK)
    jax.block_until_ready((q_vec, p_vec, n_vec))

    # validate against the pure-JAX scan-GRU reference
    q_ref = _encode_ref(query_ids, params["embedding"], params, 0, HIDDEN)
    p_ref = _encode_ref(pos_ids, params["embedding"], params, 1, HIDDEN)
    n_ref = _encode_ref(neg_ids, params["embedding"], params, 1, HIDDEN)

    assert q_vec.shape == (BATCH, HIDDEN)
    assert p_vec.shape == (BATCH, HIDDEN)
    assert n_vec.shape == (BATCH, HIDDEN)
    assert jnp.allclose(q_vec, q_ref, atol=1e-5, rtol=1e-4)
    assert jnp.allclose(p_vec, p_ref, atol=1e-5, rtol=1e-4)
    assert jnp.allclose(n_vec, n_ref, atol=1e-5, rtol=1e-4)

    print("KERNEL_OK")
</pallas_src>

<mosaic_0001>
module attributes {stable_mosaic.version = 11 : i64} {
  func.func @_two_tower_gru_kernel(%arg0: i32, %arg1: i32, %arg2: memref<1x64x32xf32, #tpu.memory_space<vmem>>, %arg3: memref<1x32x128xf32, #tpu.memory_space<vmem>>, %arg4: memref<1x128x128xf32, #tpu.memory_space<vmem>>, %arg5: memref<1x1x128xf32, #tpu.memory_space<vmem>>, %arg6: memref<1x1x128xf32, #tpu.memory_space<vmem>>, %arg7: memref<1x8x128xf32, #tpu.memory_space<vmem>>, %arg8: memref<64x128xf32, #tpu.memory_space<vmem>>) attributes {dimension_semantics = [#tpu.dimension_semantics<parallel>, #tpu.dimension_semantics<arbitrary>], iteration_bounds = array<i64: 2, 2>, scalar_prefetch = 0 : i64, scratch_operands = 1 : i64, tpu.core_type = #tpu.core_type<tc>, window_params = [{transform_indices = @transform_0, window_bounds = array<i64: 1, 64, 32>}, {transform_indices = @transform_1, window_bounds = array<i64: 1, 32, 128>}, {transform_indices = @transform_2, window_bounds = array<i64: 1, 128, 128>}, {transform_indices = @transform_3, window_bounds = array<i64: 1, 1, 128>}, {transform_indices = @transform_4, window_bounds = array<i64: 1, 1, 128>}, {transform_indices = @transform_5, window_bounds = array<i64: 1, 8, 128>}]} {
    %c0_i32 = arith.constant 0 : i32
    %0 = arith.cmpi eq, %arg1, %c0_i32 : i32
    %1 = arith.extui %0 : i1 to i32
    %c0_i32_0 = arith.constant 0 : i32
    %2 = arith.cmpi ne, %1, %c0_i32_0 : i32
    scf.if %2 {
      %cst_75 = arith.constant 0.000000e+00 : f32
      %305 = vector.broadcast %cst_75 : f32 to vector<8x128xf32>
      %c0_76 = arith.constant 0 : index
      %c0_77 = arith.constant 0 : index
      %c0_78 = arith.constant 0 : index
      %306 = vector.load %arg7[%c0_76, %c0_77, %c0_78] : memref<1x8x128xf32, #tpu.memory_space<vmem>>, vector<1x8x128xf32>
      %307 = vector.shape_cast %306 : vector<1x8x128xf32> to vector<8x128xf32>
      %308 = vector.shape_cast %305 : vector<8x128xf32> to vector<1x8x128xf32>
      tpu.vector_store %arg7[%c0_76, %c0_77, %c0_78], %308 {strides = array<i32>} : memref<1x8x128xf32, #tpu.memory_space<vmem>>, vector<1x8x128xf32>,
    } else {
    }
    %c0 = arith.constant 0 : index
    %c0_1 = arith.constant 0 : index
    %c0_2 = arith.constant 0 : index
    %3 = vector.load %arg2[%c0, %c0_1, %c0_2] : memref<1x64x32xf32, #tpu.memory_space<vmem>>, vector<1x64x32xf32>
    %4 = vector.shape_cast %3 : vector<1x64x32xf32> to vector<64x32xf32>
    %c0_3 = arith.constant 0 : index
    %c0_4 = arith.constant 0 : index
    %c0_5 = arith.constant 0 : index
    %5 = vector.load %arg3[%c0_3, %c0_4, %c0_5] : memref<1x32x128xf32, #tpu.memory_space<vmem>>, vector<1x32x128xf32>
    %6 = vector.shape_cast %5 : vector<1x32x128xf32> to vector<32x128xf32>
    %cst = arith.constant dense<0.000000e+00> : vector<64x128xf32>
    %7 = tpu.matmul %4, %6, %cst {dimension_numbers = #tpu.dot_dimension_numbers<[1], [0], [0], [1], [0, 0, 1, 1], [], []>} : vector<64x32xf32>, vector<32x128xf32>, vector<64x128xf32> -> vector<64x128xf32>
    %c0_6 = arith.constant 0 : index
    %c0_7 = arith.constant 0 : index
    %c0_8 = arith.constant 0 : index
    %8 = vector.load %arg5[%c0_6, %c0_7, %c0_8] : memref<1x1x128xf32, #tpu.memory_space<vmem>>, vector<1x1x128xf32>
    %9 = vector.shape_cast %8 : vector<1x1x128xf32> to vector<1x128xf32>
    %10 = vector.broadcast %9 : vector<1x128xf32> to vector<64x128xf32>
    %11 = arith.addf %7, %10 : vector<64x128xf32>
    %c0_9 = arith.constant 0 : index
    %c0_10 = arith.constant 0 : index
    %12 = vector.load %arg8[%c0_9, %c0_10] : memref<64x128xf32, #tpu.memory_space<vmem>>, vector<64x128xf32>
    tpu.vector_store %arg8[%c0_9, %c0_10], %11 {strides = array<i32>} : memref<64x128xf32, #tpu.memory_space<vmem>>, vector<64x128xf32>,
    %c0_11 = arith.constant 0 : index
    %c0_12 = arith.constant 0 : index
    %c0_13 = arith.constant 0 : index
    %13 = vector.load %arg4[%c0_11, %c0_12, %c0_13] : memref<1x128x128xf32, #tpu.memory_space<vmem>>, vector<1x128x128xf32>
    %14 = vector.shape_cast %13 : vector<1x128x128xf32> to vector<128x128xf32>
    %c0_14 = arith.constant 0 : index
    %c0_15 = arith.constant 0 : index
    %c0_16 = arith.constant 0 : index
    %15 = vector.load %arg6[%c0_14, %c0_15, %c0_16] : memref<1x1x128xf32, #tpu.memory_space<vmem>>, vector<1x1x128xf32>
    %16 = vector.shape_cast %15 : vector<1x1x128xf32> to vector<1x128xf32>
    %c4_i32 = arith.constant 4 : i32
    %17 = arith.muli %arg0, %c4_i32 : i32
    %c8_i32 = arith.constant 8 : i32
    %18 = arith.addi %c8_i32, %17 : i32
    %c8_i32_17 = arith.constant 8 : i32
    %19 = arith.muli %arg1, %c8_i32_17 : i32
    %c0_18 = arith.constant 0 : index
    %c0_19 = arith.constant 0 : index
    %c0_20 = arith.constant 0 : index
    %20 = vector.load %arg7[%c0_18, %c0_19, %c0_20] : memref<1x8x128xf32, #tpu.memory_space<vmem>>, vector<1x8x128xf32>
    %21 = vector.shape_cast %20 : vector<1x8x128xf32> to vector<8x128xf32>
    %c0_i32_21 = arith.constant 0 : i32
    %c8_i32_22 = arith.constant 8 : i32
    %22 = arith.muli %c0_i32_21, %c8_i32_22 : i32
    %23 = tpu.assume_multiple %22, 8 : i32
    %24 = arith.index_cast %23 : i32 to index
    %c0_23 = arith.constant 0 : index
    %25 = vector.load %arg8[%24, %c0_23] : memref<64x128xf32, #tpu.memory_space<vmem>>, vector<8x128xf32>
    %cst_24 = arith.constant dense<0.000000e+00> : vector<8x128xf32>
    %26 = tpu.matmul %21, %14, %cst_24 {dimension_numbers = #tpu.dot_dimension_numbers<[1], [0], [0], [1], [0, 0, 1, 1], [], []>} : vector<8x128xf32>, vector<128x128xf32>, vector<8x128xf32> -> vector<8x128xf32>
    %27 = vector.broadcast %16 : vector<1x128xf32> to vector<8x128xf32>
    %28 = arith.addf %26, %27 : vector<8x128xf32>
    %29 = arith.addf %25, %28 : vector<8x128xf32>
    %30 = arith.negf %29 : vector<8x128xf32>
    %31 = math.exp %30 : vector<8x128xf32>
    %cst_25 = arith.constant 1.000000e+00 : f32
    %32 = vector.broadcast %cst_25 : f32 to vector<8x128xf32>
    %33 = arith.addf %32, %31 : vector<8x128xf32>
    %34 = arith.divf %32, %33 : vector<8x128xf32>
    %35 = tpu.concatenate %34, %34 in 1 : vector<8x128xf32>, vector<8x128xf32> -> vector<8x256xf32>
    %36 = vector.extract_strided_slice %35 {offsets = [0, 32], sizes = [8, 128], strides = [1, 1]} : vector<8x256xf32> to vector<8x128xf32>
    %37 = arith.mulf %36, %28 : vector<8x128xf32>
    %38 = arith.addf %25, %37 : vector<8x128xf32>
    %39 = math.tanh %38 : vector<8x128xf32>
    %40 = tpu.concatenate %36, %36 in 1 : vector<8x128xf32>, vector<8x128xf32> -> vector<8x256xf32>
    %41 = vector.extract_strided_slice %40 {offsets = [0, 32], sizes = [8, 128], strides = [1, 1]} : vector<8x256xf32> to vector<8x128xf32>
    %cst_26 = arith.constant 1.000000e+00 : f32
    %42 = vector.broadcast %cst_26 : f32 to vector<8x128xf32>
    %43 = arith.subf %42, %41 : vector<8x128xf32>
    %44 = arith.mulf %43, %39 : vector<8x128xf32>
    %45 = arith.mulf %41, %21 : vector<8x128xf32>
    %46 = arith.addf %44, %45 : vector<8x128xf32>
    %47 = arith.addi %19, %c0_i32_21 : i32
    %48 = arith.cmpi slt, %47, %18 : i32
    %49 = arith.extui %48 : i1 to i32
    %50 = arith.sitofp %49 : i32 to f32
    %51 = vector.broadcast %50 : f32 to vector<8x128xf32>
    %52 = arith.mulf %51, %46 : vector<8x128xf32>
    %cst_27 = arith.constant 1.000000e+00 : f32
    %53 = arith.subf %cst_27, %50 : f32
    %54 = vector.broadcast %53 : f32 to vector<8x128xf32>
    %55 = arith.mulf %54, %21 : vector<8x128xf32>
    %56 = arith.addf %52, %55 : vector<8x128xf32>
    %c1_i32 = arith.constant 1 : i32
    %c8_i32_28 = arith.constant 8 : i32
    %57 = arith.muli %c1_i32, %c8_i32_28 : i32
    %58 = tpu.assume_multiple %57, 8 : i32
    %59 = arith.index_cast %58 : i32 to index
    %c0_29 = arith.constant 0 : index
    %60 = vector.load %arg8[%59, %c0_29] : memref<64x128xf32, #tpu.memory_space<vmem>>, vector<8x128xf32>
    %cst_30 = arith.constant dense<0.000000e+00> : vector<8x128xf32>
    %61 = tpu.matmul %56, %14, %cst_30 {dimension_numbers = #tpu.dot_dimension_numbers<[1], [0], [0], [1], [0, 0, 1, 1], [], []>} : vector<8x128xf32>, vector<128x128xf32>, vector<8x128xf32> -> vector<8x128xf32>
    %62 = vector.broadcast %16 : vector<1x128xf32> to vector<8x128xf32>
    %63 = arith.addf %61, %62 : vector<8x128xf32>
    %64 = arith.addf %60, %63 : vector<8x128xf32>
    %65 = arith.negf %64 : vector<8x128xf32>
    %66 = math.exp %65 : vector<8x128xf32>
    %cst_31 = arith.constant 1.000000e+00 : f32
    %67 = vector.broadcast %cst_31 : f32 to vector<8x128xf32>
    %68 = arith.addf %67, %66 : vector<8x128xf32>
    %69 = arith.divf %67, %68 : vector<8x128xf32>
    %70 = tpu.concatenate %69, %69 in 1 : vector<8x128xf32>, vector<8x128xf32> -> vector<8x256xf32>
    %71 = vector.extract_strided_slice %70 {offsets = [0, 32], sizes = [8, 128], strides = [1, 1]} : vector<8x256xf32> to vector<8x128xf32>
    %72 = arith.mulf %71, %63 : vector<8x128xf32>
    %73 = arith.addf %60, %72 : vector<8x128xf32>
    %74 = math.tanh %73 : vector<8x128xf32>
    %75 = tpu.concatenate %71, %71 in 1 : vector<8x128xf32>, vector<8x128xf32> -> vector<8x256xf32>
    %76 = vector.extract_strided_slice %75 {offsets = [0, 32], sizes = [8, 128], strides = [1, 1]} : vector<8x256xf32> to vector<8x128xf32>
    %cst_32 = arith.constant 1.000000e+00 : f32
    %77 = vector.broadcast %cst_32 : f32 to vector<8x128xf32>
    %78 = arith.subf %77, %76 : vector<8x128xf32>
    %79 = arith.mulf %78, %74 : vector<8x128xf32>
    %80 = arith.mulf %76, %56 : vector<8x128xf32>
    %81 = arith.addf %79, %80 : vector<8x128xf32>
    %82 = arith.addi %19, %c1_i32 : i32
    %83 = arith.cmpi slt, %82, %18 : i32
    %84 = arith.extui %83 : i1 to i32
    %85 = arith.sitofp %84 : i32 to f32
    %86 = vector.broadcast %85 : f32 to vector<8x128xf32>
    %87 = arith.mulf %86, %81 : vector<8x128xf32>
    %cst_33 = arith.constant 1.000000e+00 : f32
    %88 = arith.subf %cst_33, %85 : f32
    %89 = vector.broadcast %88 : f32 to vector<8x128xf32>
    %90 = arith.mulf %89, %56 : vector<8x128xf32>
    %91 = arith.addf %87, %90 : vector<8x128xf32>
    %c2_i32 = arith.constant 2 : i32
    %c8_i32_34 = arith.constant 8 : i32
    %92 = arith.muli %c2_i32, %c8_i32_34 : i32
    %93 = tpu.assume_multiple %92, 8 : i32
    %94 = arith.index_cast %93 : i32 to index
    %c0_35 = arith.constant 0 : index
    %95 = vector.load %arg8[%94, %c0_35] : memref<64x128xf32, #tpu.memory_space<vmem>>, vector<8x128xf32>
    %cst_36 = arith.constant dense<0.000000e+00> : vector<8x128xf32>
    %96 = tpu.matmul %91, %14, %cst_36 {dimension_numbers = #tpu.dot_dimension_numbers<[1], [0], [0], [1], [0, 0, 1, 1], [], []>} : vector<8x128xf32>, vector<128x128xf32>, vector<8x128xf32> -> vector<8x128xf32>
    %97 = vector.broadcast %16 : vector<1x128xf32> to vector<8x128xf32>
    %98 = arith.addf %96, %97 : vector<8x128xf32>
    %99 = arith.addf %95, %98 : vector<8x128xf32>
    %100 = arith.negf %99 : vector<8x128xf32>
    %101 = math.exp %100 : vector<8x128xf32>
    %cst_37 = arith.constant 1.000000e+00 : f32
    %102 = vector.broadcast %cst_37 : f32 to vector<8x128xf32>
    %103 = arith.addf %102, %101 : vector<8x128xf32>
    %104 = arith.divf %102, %103 : vector<8x128xf32>
    %105 = tpu.concatenate %104, %104 in 1 : vector<8x128xf32>, vector<8x128xf32> -> vector<8x256xf32>
    %106 = vector.extract_strided_slice %105 {offsets = [0, 32], sizes = [8, 128], strides = [1, 1]} : vector<8x256xf32> to vector<8x128xf32>
    %107 = arith.mulf %106, %98 : vector<8x128xf32>
    %108 = arith.addf %95, %107 : vector<8x128xf32>
    %109 = math.tanh %108 : vector<8x128xf32>
    %110 = tpu.concatenate %106, %106 in 1 : vector<8x128xf32>, vector<8x128xf32> -> vector<8x256xf32>
    %111 = vector.extract_strided_slice %110 {offsets = [0, 32], sizes = [8, 128], strides = [1, 1]} : vector<8x256xf32> to vector<8x128xf32>
    %cst_38 = arith.constant 1.000000e+00 : f32
    %112 = vector.broadcast %cst_38 : f32 to vector<8x128xf32>
    %113 = arith.subf %112, %111 : vector<8x128xf32>
    %114 = arith.mulf %113, %109 : vector<8x128xf32>
    %115 = arith.mulf %111, %91 : vector<8x128xf32>
    %116 = arith.addf %114, %115 : vector<8x128xf32>
    %117 = arith.addi %19, %c2_i32 : i32
    %118 = arith.cmpi slt, %117, %18 : i32
    %119 = arith.extui %118 : i1 to i32
    %120 = arith.sitofp %119 : i32 to f32
    %121 = vector.broadcast %120 : f32 to vector<8x128xf32>
    %122 = arith.mulf %121, %116 : vector<8x128xf32>
    %cst_39 = arith.constant 1.000000e+00 : f32
    %123 = arith.subf %cst_39, %120 : f32
    %124 = vector.broadcast %123 : f32 to vector<8x128xf32>
    %125 = arith.mulf %124, %91 : vector<8x128xf32>
    %126 = arith.addf %122, %125 : vector<8x128xf32>
    %c3_i32 = arith.constant 3 : i32
    %c8_i32_40 = arith.constant 8 : i32
    %127 = arith.muli %c3_i32, %c8_i32_40 : i32
    %128 = tpu.assume_multiple %127, 8 : i32
    %129 = arith.index_cast %128 : i32 to index
    %c0_41 = arith.constant 0 : index
    %130 = vector.load %arg8[%129, %c0_41] : memref<64x128xf32, #tpu.memory_space<vmem>>, vector<8x128xf32>
    %cst_42 = arith.constant dense<0.000000e+00> : vector<8x128xf32>
    %131 = tpu.matmul %126, %14, %cst_42 {dimension_numbers = #tpu.dot_dimension_numbers<[1], [0], [0], [1], [0, 0, 1, 1], [], []>} : vector<8x128xf32>, vector<128x128xf32>, vector<8x128xf32> -> vector<8x128xf32>
    %132 = vector.broadcast %16 : vector<1x128xf32> to vector<8x128xf32>
    %133 = arith.addf %131, %132 : vector<8x128xf32>
    %134 = arith.addf %130, %133 : vector<8x128xf32>
    %135 = arith.negf %134 : vector<8x128xf32>
    %136 = math.exp %135 : vector<8x128xf32>
    %cst_43 = arith.constant 1.000000e+00 : f32
    %137 = vector.broadcast %cst_43 : f32 to vector<8x128xf32>
    %138 = arith.addf %137, %136 : vector<8x128xf32>
    %139 = arith.divf %137, %138 : vector<8x128xf32>
    %140 = tpu.concatenate %139, %139 in 1 : vector<8x128xf32>, vector<8x128xf32> -> vector<8x256xf32>
    %141 = vector.extract_strided_slice %140 {offsets = [0, 32], sizes = [8, 128], strides = [1, 1]} : vector<8x256xf32> to vector<8x128xf32>
    %142 = arith.mulf %141, %133 : vector<8x128xf32>
    %143 = arith.addf %130, %142 : vector<8x128xf32>
    %144 = math.tanh %143 : vector<8x128xf32>
    %145 = tpu.concatenate %141, %141 in 1 : vector<8x128xf32>, vector<8x128xf32> -> vector<8x256xf32>
    %146 = vector.extract_strided_slice %145 {offsets = [0, 32], sizes = [8, 128], strides = [1, 1]} : vector<8x256xf32> to vector<8x128xf32>
    %cst_44 = arith.constant 1.000000e+00 : f32
    %147 = vector.broadcast %cst_44 : f32 to vector<8x128xf32>
    %148 = arith.subf %147, %146 : vector<8x128xf32>
    %149 = arith.mulf %148, %144 : vector<8x128xf32>
    %150 = arith.mulf %146, %126 : vector<8x128xf32>
    %151 = arith.addf %149, %150 : vector<8x128xf32>
    %152 = arith.addi %19, %c3_i32 : i32
    %153 = arith.cmpi slt, %152, %18 : i32
    %154 = arith.extui %153 : i1 to i32
    %155 = arith.sitofp %154 : i32 to f32
    %156 = vector.broadcast %155 : f32 to vector<8x128xf32>
    %157 = arith.mulf %156, %151 : vector<8x128xf32>
    %cst_45 = arith.constant 1.000000e+00 : f32
    %158 = arith.subf %cst_45, %155 : f32
    %159 = vector.broadcast %158 : f32 to vector<8x128xf32>
    %160 = arith.mulf %159, %126 : vector<8x128xf32>
    %161 = arith.addf %157, %160 : vector<8x128xf32>
    %c4_i32_46 = arith.constant 4 : i32
    %c8_i32_47 = arith.constant 8 : i32
    %162 = arith.muli %c4_i32_46, %c8_i32_47 : i32
    %163 = tpu.assume_multiple %162, 8 : i32
    %164 = arith.index_cast %163 : i32 to index
    %c0_48 = arith.constant 0 : index
    %165 = vector.load %arg8[%164, %c0_48] : memref<64x128xf32, #tpu.memory_space<vmem>>, vector<8x128xf32>
    %cst_49 = arith.constant dense<0.000000e+00> : vector<8x128xf32>
    %166 = tpu.matmul %161, %14, %cst_49 {dimension_numbers = #tpu.dot_dimension_numbers<[1], [0], [0], [1], [0, 0, 1, 1], [], []>} : vector<8x128xf32>, vector<128x128xf32>, vector<8x128xf32> -> vector<8x128xf32>
    %167 = vector.broadcast %16 : vector<1x128xf32> to vector<8x128xf32>
    %168 = arith.addf %166, %167 : vector<8x128xf32>
    %169 = arith.addf %165, %168 : vector<8x128xf32>
    %170 = arith.negf %169 : vector<8x128xf32>
    %171 = math.exp %170 : vector<8x128xf32>
    %cst_50 = arith.constant 1.000000e+00 : f32
    %172 = vector.broadcast %cst_50 : f32 to vector<8x128xf32>
    %173 = arith.addf %172, %171 : vector<8x128xf32>
    %174 = arith.divf %172, %173 : vector<8x128xf32>
    %175 = tpu.concatenate %174, %174 in 1 : vector<8x128xf32>, vector<8x128xf32> -> vector<8x256xf32>
    %176 = vector.extract_strided_slice %175 {offsets = [0, 32], sizes = [8, 128], strides = [1, 1]} : vector<8x256xf32> to vector<8x128xf32>
    %177 = arith.mulf %176, %168 : vector<8x128xf32>
    %178 = arith.addf %165, %177 : vector<8x128xf32>
    %179 = math.tanh %178 : vector<8x128xf32>
    %180 = tpu.concatenate %176, %176 in 1 : vector<8x128xf32>, vector<8x128xf32> -> vector<8x256xf32>
    %181 = vector.extract_strided_slice %180 {offsets = [0, 32], sizes = [8, 128], strides = [1, 1]} : vector<8x256xf32> to vector<8x128xf32>
    %cst_51 = arith.constant 1.000000e+00 : f32
    %182 = vector.broadcast %cst_51 : f32 to vector<8x128xf32>
    %183 = arith.subf %182, %181 : vector<8x128xf32>
    %184 = arith.mulf %183, %179 : vector<8x128xf32>
    %185 = arith.mulf %181, %161 : vector<8x128xf32>
    %186 = arith.addf %184, %185 : vector<8x128xf32>
    %187 = arith.addi %19, %c4_i32_46 : i32
    %188 = arith.cmpi slt, %187, %18 : i32
    %189 = arith.extui %188 : i1 to i32
    %190 = arith.sitofp %189 : i32 to f32
    %191 = vector.broadcast %190 : f32 to vector<8x128xf32>
    %192 = arith.mulf %191, %186 : vector<8x128xf32>
    %cst_52 = arith.constant 1.000000e+00 : f32
    %193 = arith.subf %cst_52, %190 : f32
    %194 = vector.broadcast %193 : f32 to vector<8x128xf32>
    %195 = arith.mulf %194, %161 : vector<8x128xf32>
    %196 = arith.addf %192, %195 : vector<8x128xf32>
    %c5_i32 = arith.constant 5 : i32
    %c8_i32_53 = arith.constant 8 : i32
    %197 = arith.muli %c5_i32, %c8_i32_53 : i32
    %198 = tpu.assume_multiple %197, 8 : i32
    %199 = arith.index_cast %198 : i32 to index
    %c0_54 = arith.constant 0 : index
    %200 = vector.load %arg8[%199, %c0_54] : memref<64x128xf32, #tpu.memory_space<vmem>>, vector<8x128xf32>
    %cst_55 = arith.constant dense<0.000000e+00> : vector<8x128xf32>
    %201 = tpu.matmul %196, %14, %cst_55 {dimension_numbers = #tpu.dot_dimension_numbers<[1], [0], [0], [1], [0, 0, 1, 1], [], []>} : vector<8x128xf32>, vector<128x128xf32>, vector<8x128xf32> -> vector<8x128xf32>
    %202 = vector.broadcast %16 : vector<1x128xf32> to vector<8x128xf32>
    %203 = arith.addf %201, %202 : vector<8x128xf32>
    %204 = arith.addf %200, %203 : vector<8x128xf32>
    %205 = arith.negf %204 : vector<8x128xf32>
    %206 = math.exp %205 : vector<8x128xf32>
    %cst_56 = arith.constant 1.000000e+00 : f32
    %207 = vector.broadcast %cst_56 : f32 to vector<8x128xf32>
    %208 = arith.addf %207, %206 : vector<8x128xf32>
    %209 = arith.divf %207, %208 : vector<8x128xf32>
    %210 = tpu.concatenate %209, %209 in 1 : vector<8x128xf32>, vector<8x128xf32> -> vector<8x256xf32>
    %211 = vector.extract_strided_slice %210 {offsets = [0, 32], sizes = [8, 128], strides = [1, 1]} : vector<8x256xf32> to vector<8x128xf32>
    %212 = arith.mulf %211, %203 : vector<8x128xf32>
    %213 = arith.addf %200, %212 : vector<8x128xf32>
    %214 = math.tanh %213 : vector<8x128xf32>
    %215 = tpu.concatenate %211, %211 in 1 : vector<8x128xf32>, vector<8x128xf32> -> vector<8x256xf32>
    %216 = vector.extract_strided_slice %215 {offsets = [0, 32], sizes = [8, 128], strides = [1, 1]} : vector<8x256xf32> to vector<8x128xf32>
    %cst_57 = arith.constant 1.000000e+00 : f32
    %217 = vector.broadcast %cst_57 : f32 to vector<8x128xf32>
    %218 = arith.subf %217, %216 : vector<8x128xf32>
    %219 = arith.mulf %218, %214 : vector<8x128xf32>
    %220 = arith.mulf %216, %196 : vector<8x128xf32>
    %221 = arith.addf %219, %220 : vector<8x128xf32>
    %222 = arith.addi %19, %c5_i32 : i32
    %223 = arith.cmpi slt, %222, %18 : i32
    %224 = arith.extui %223 : i1 to i32
    %225 = arith.sitofp %224 : i32 to f32
    %226 = vector.broadcast %225 : f32 to vector<8x128xf32>
    %227 = arith.mulf %226, %221 : vector<8x128xf32>
    %cst_58 = arith.constant 1.000000e+00 : f32
    %228 = arith.subf %cst_58, %225 : f32
    %229 = vector.broadcast %228 : f32 to vector<8x128xf32>
    %230 = arith.mulf %229, %196 : vector<8x128xf32>
    %231 = arith.addf %227, %230 : vector<8x128xf32>
    %c6_i32 = arith.constant 6 : i32
    %c8_i32_59 = arith.constant 8 : i32
    %232 = arith.muli %c6_i32, %c8_i32_59 : i32
    %233 = tpu.assume_multiple %232, 8 : i32
    %234 = arith.index_cast %233 : i32 to index
    %c0_60 = arith.constant 0 : index
    %235 = vector.load %arg8[%234, %c0_60] : memref<64x128xf32, #tpu.memory_space<vmem>>, vector<8x128xf32>
    %cst_61 = arith.constant dense<0.000000e+00> : vector<8x128xf32>
    %236 = tpu.matmul %231, %14, %cst_61 {dimension_numbers = #tpu.dot_dimension_numbers<[1], [0], [0], [1], [0, 0, 1, 1], [], []>} : vector<8x128xf32>, vector<128x128xf32>, vector<8x128xf32> -> vector<8x128xf32>
    %237 = vector.broadcast %16 : vector<1x128xf32> to vector<8x128xf32>
    %238 = arith.addf %236, %237 : vector<8x128xf32>
    %239 = arith.addf %235, %238 : vector<8x128xf32>
    %240 = arith.negf %239 : vector<8x128xf32>
    %241 = math.exp %240 : vector<8x128xf32>
    %cst_62 = arith.constant 1.000000e+00 : f32
    %242 = vector.broadcast %cst_62 : f32 to vector<8x128xf32>
    %243 = arith.addf %242, %241 : vector<8x128xf32>
    %244 = arith.divf %242, %243 : vector<8x128xf32>
    %245 = tpu.concatenate %244, %244 in 1 : vector<8x128xf32>, vector<8x128xf32> -> vector<8x256xf32>
    %246 = vector.extract_strided_slice %245 {offsets = [0, 32], sizes = [8, 128], strides = [1, 1]} : vector<8x256xf32> to vector<8x128xf32>
    %247 = arith.mulf %246, %238 : vector<8x128xf32>
    %248 = arith.addf %235, %247 : vector<8x128xf32>
    %249 = math.tanh %248 : vector<8x128xf32>
    %250 = tpu.concatenate %246, %246 in 1 : vector<8x128xf32>, vector<8x128xf32> -> vector<8x256xf32>
    %251 = vector.extract_strided_slice %250 {offsets = [0, 32], sizes = [8, 128], strides = [1, 1]} : vector<8x256xf32> to vector<8x128xf32>
    %cst_63 = arith.constant 1.000000e+00 : f32
    %252 = vector.broadcast %cst_63 : f32 to vector<8x128xf32>
    %253 = arith.subf %252, %251 : vector<8x128xf32>
    %254 = arith.mulf %253, %249 : vector<8x128xf32>
    %255 = arith.mulf %251, %231 : vector<8x128xf32>
    %256 = arith.addf %254, %255 : vector<8x128xf32>
    %257 = arith.addi %19, %c6_i32 : i32
    %258 = arith.cmpi slt, %257, %18 : i32
    %259 = arith.extui %258 : i1 to i32
    %260 = arith.sitofp %259 : i32 to f32
    %261 = vector.broadcast %260 : f32 to vector<8x128xf32>
    %262 = arith.mulf %261, %256 : vector<8x128xf32>
    %cst_64 = arith.constant 1.000000e+00 : f32
    %263 = arith.subf %cst_64, %260 : f32
    %264 = vector.broadcast %263 : f32 to vector<8x128xf32>
    %265 = arith.mulf %264, %231 : vector<8x128xf32>
    %266 = arith.addf %262, %265 : vector<8x128xf32>
    %c7_i32 = arith.constant 7 : i32
    %c8_i32_65 = arith.constant 8 : i32
    %267 = arith.muli %c7_i32, %c8_i32_65 : i32
    %268 = tpu.assume_multiple %267, 8 : i32
    %269 = arith.index_cast %268 : i32 to index
    %c0_66 = arith.constant 0 : index
    %270 = vector.load %arg8[%269, %c0_66] : memref<64x128xf32, #tpu.memory_space<vmem>>, vector<8x128xf32>
    %cst_67 = arith.constant dense<0.000000e+00> : vector<8x128xf32>
    %271 = tpu.matmul %266, %14, %cst_67 {dimension_numbers = #tpu.dot_dimension_numbers<[1], [0], [0], [1], [0, 0, 1, 1], [], []>} : vector<8x128xf32>, vector<128x128xf32>, vector<8x128xf32> -> vector<8x128xf32>
    %272 = vector.broadcast %16 : vector<1x128xf32> to vector<8x128xf32>
    %273 = arith.addf %271, %272 : vector<8x128xf32>
    %274 = arith.addf %270, %273 : vector<8x128xf32>
    %275 = arith.negf %274 : vector<8x128xf32>
    %276 = math.exp %275 : vector<8x128xf32>
    %cst_68 = arith.constant 1.000000e+00 : f32
    %277 = vector.broadcast %cst_68 : f32 to vector<8x128xf32>
    %278 = arith.addf %277, %276 : vector<8x128xf32>
    %279 = arith.divf %277, %278 : vector<8x128xf32>
    %280 = tpu.concatenate %279, %279 in 1 : vector<8x128xf32>, vector<8x128xf32> -> vector<8x256xf32>
    %281 = vector.extract_strided_slice %280 {offsets = [0, 32], sizes = [8, 128], strides = [1, 1]} : vector<8x256xf32> to vector<8x128xf32>
    %282 = arith.mulf %281, %273 : vector<8x128xf32>
    %283 = arith.addf %270, %282 : vector<8x128xf32>
    %284 = math.tanh %283 : vector<8x128xf32>
    %285 = tpu.concatenate %281, %281 in 1 : vector<8x128xf32>, vector<8x128xf32> -> vector<8x256xf32>
    %286 = vector.extract_strided_slice %285 {offsets = [0, 32], sizes = [8, 128], strides = [1, 1]} : vector<8x256xf32> to vector<8x128xf32>
    %cst_69 = arith.constant 1.000000e+00 : f32
    %287 = vector.broadcast %cst_69 : f32 to vector<8x128xf32>
    %288 = arith.subf %287, %286 : vector<8x128xf32>
    %289 = arith.mulf %288, %284 : vector<8x128xf32>
    %290 = arith.mulf %286, %266 : vector<8x128xf32>
    %291 = arith.addf %289, %290 : vector<8x128xf32>
    %292 = arith.addi %19, %c7_i32 : i32
    %293 = arith.cmpi slt, %292, %18 : i32
    %294 = arith.extui %293 : i1 to i32
    %295 = arith.sitofp %294 : i32 to f32
    %296 = vector.broadcast %295 : f32 to vector<8x128xf32>
    %297 = arith.mulf %296, %291 : vector<8x128xf32>
    %cst_70 = arith.constant 1.000000e+00 : f32
    %298 = arith.subf %cst_70, %295 : f32
    %299 = vector.broadcast %298 : f32 to vector<8x128xf32>
    %300 = arith.mulf %299, %266 : vector<8x128xf32>
    %301 = arith.addf %297, %300 : vector<8x128xf32>
    %c8_i32_71 = arith.constant 8 : i32
    %c0_72 = arith.constant 0 : index
    %c0_73 = arith.constant 0 : index
    %c0_74 = arith.constant 0 : index
    %302 = vector.load %arg7[%c0_72, %c0_73, %c0_74] : memref<1x8x128xf32, #tpu.memory_space<vmem>>, vector<1x8x128xf32>
    %303 = vector.shape_cast %302 : vector<1x8x128xf32> to vector<8x128xf32>
    %304 = vector.shape_cast %301 : vector<8x128xf32> to vector<1x8x128xf32>
    tpu.vector_store %arg7[%c0_72, %c0_73, %c0_74], %304 {strides = array<i32>} : memref<1x8x128xf32, #tpu.memory_space<vmem>>, vector<1x8x128xf32>,
    return
  }
  func.func @transform_0(%arg0: i32, %arg1: i32) -> (i32, i32, i32) {
    %c0_i32 = arith.constant 0 : i32
    %c0_i32_0 = arith.constant 0 : i32
    return %arg0, %arg1, %c0_i32 : i32, i32, i32
  }
  func.func @transform_1(%arg0: i32, %arg1: i32) -> (i32, i32, i32) {
    %c0_i32 = arith.constant 0 : i32
    %c0_i32_0 = arith.constant 0 : i32
    %c0_i32_1 = arith.constant 0 : i32
    return %arg0, %c0_i32, %c0_i32_0 : i32, i32, i32
  }
  func.func @transform_2(%arg0: i32, %arg1: i32) -> (i32, i32, i32) {
    %c0_i32 = arith.constant 0 : i32
    %c0_i32_0 = arith.constant 0 : i32
    %c0_i32_1 = arith.constant 0 : i32
    return %arg0, %c0_i32, %c0_i32_0 : i32, i32, i32
  }
  func.func @transform_3(%arg0: i32, %arg1: i32) -> (i32, i32, i32) {
    %c0_i32 = arith.constant 0 : i32
    %c0_i32_0 = arith.constant 0 : i32
    %c0_i32_1 = arith.constant 0 : i32
    return %arg0, %c0_i32, %c0_i32_0 : i32, i32, i32
  }
  func.func @transform_4(%arg0: i32, %arg1: i32) -> (i32, i32, i32) {
    %c0_i32 = arith.constant 0 : i32
    %c0_i32_0 = arith.constant 0 : i32
    %c0_i32_1 = arith.constant 0 : i32
    return %arg0, %c0_i32, %c0_i32_0 : i32, i32, i32
  }
  func.func @transform_5(%arg0: i32, %arg1: i32) -> (i32, i32, i32) {
    %c0_i32 = arith.constant 0 : i32
    %c0_i32_0 = arith.constant 0 : i32
    %c0_i32_1 = arith.constant 0 : i32
    return %arg0, %c0_i32, %c0_i32_0 : i32, i32, i32
  }
}

</mosaic_0001>

<llo_original>
// kernel: two_tower_forward.1
$region0: #{two_tower_forward.1}
  #allocation0 [shape = 'u32[]', space=smem, size = 0x4, offset = 0x4, fixed_abs, tag = 'smem constant byte address 0x4 - core index']
  #allocation1 [shape = 'u32[72,128]{1,0:T(1,128)}', space=vmem, size = 0x9000, scoped, tag = 'internal scratch']
  #allocation2 [shape = 'f32[64,128]{1,0:T(8,128)}', space=vmem, size = 0x8000, scoped, tag = 'scratch operand']
  %s0 = inlined_call_operand.vmem [shape: f32[2,128,32], index: 0, kind: input, shape index: {}]
  %s1 = inlined_call_operand.vmem [shape: f32[2,32,128], index: 1, kind: input, shape index: {}]
  %s2 = inlined_call_operand.vmem [shape: f32[2,128,128], index: 2, kind: input, shape index: {}]
  %s3 = inlined_call_operand.vmem [shape: f32[2,1,128], index: 3, kind: input, shape index: {}]
  %s4 = inlined_call_operand.vmem [shape: f32[2,1,128], index: 4, kind: input, shape index: {}]
  %s5 = inlined_call_operand.vmem [shape: f32[2,8,128], index: 5, kind: output, shape index: {}]
  %s6 = sld [smem:[#allocation0]]
  $region57: #{two_tower_forward.1} parent=0
    _
  %s8 = ssub.s32 1, %s6
  %s9 = scalar_select 0, %s8, %s6
  loop: start=0, step=1, limit=6
  $region2: #{two_tower_forward.1} parent=0 // loop_pre_header
    _
  $region3: #{two_tower_forward.1} parent=0 // loop_header
    %s11 = sphi 0, %s15
    %p12 = scmp.ge.s32.totalorder %s11, 6
    %s18 = sphi 0, %s30
    %s19 = sphi 0, %s26
    %s20 = sphi 0, %s18
    %s21 = sphi 0, %s19
    %s22 = sphi 0, %s20
    %s23 = sphi 0, %s21
    %s35 = sphi 0, %s37
    %s38 = sphi 0, %s35
    %s39 = sphi 0, %s38
    %s55 = sphi 0, %s39
    %s61 = sphi 0, %s63
    %s64 = sphi 0, %s61
    %s65 = sphi 0, %s64
    %s81 = sphi 0, %s65
    %s87 = sphi 0, %s89
    %s90 = sphi 0, %s87
    %s91 = sphi 0, %s90
    %s107 = sphi 0, %s91
    %s113 = sphi 0, %s115
    %s116 = sphi 0, %s113
    %s117 = sphi 0, %s116
    %s133 = sphi 0, %s117
    %s139 = sphi 0, %s141
    %s142 = sphi 0, %s139
    %s143 = sphi 0, %s142
    %s159 = sphi 0, %s143
    %s165 = sphi 0, %s167
    %s168 = sphi 0, %s165
    %s169 = sphi 0, %s168
    %s185 = sphi 0, %s169
  $region4: #{two_tower_forward.1} parent=0 // loop_header_branch
    %14 = sbr.rel (%p12) target = $region8
  $region5: #{two_tower_forward.1} parent=0 // loop_body
    %s16 = ssub.s32 %s11, 1
    %s17 = ssub.s32 %s11, 2
    %s24 = sadd.s32 1, %s19
    %p25 = scmp.ge.s32.totalorder %s24, 2
    %s26 = scalar_select %p25, 0, %s24
    %s27 = sadd.s32 1, %s18
    %s28 = scalar_select %p25, %s27, %s18
    %p29 = scmp.ge.s32.totalorder %s28, 2
    %s30 = scalar_select %p29, 0, %s28
    %s31 = ssub.s32 %s18, %s30
    %s32 = ssub.s32 %s19, %s26
    %s33 = sor.u32 %s31, %s32
    %p34 = scmp.eq.s32.totalorder %s33, 0
    %s36 = sadd.s32 %s35, 1
    %s37 = scalar_select %p34, %s35, %s36
    %p40 = pneg %p34
    %p41 = scmp.eq.s32.totalorder %s11, 3
    %p42 = por %p40, %p41
    %p43 = scmp.ne.s32.totalorder %s35, %s38
    %p44 = scmp.eq.s32.totalorder %s11, 0
    %p45 = por %p43, %p44
    %p46 = scmp.ne.s32.totalorder %s35, %s38
    %p47 = scmp.eq.s32.totalorder %s16, 3
    %p48 = por %p46, %p47
    %p49 = scmp.ne.s32.totalorder %s38, %s39
    %p50 = scmp.eq.s32.totalorder %s16, 0
    %p51 = por %p49, %p50
    %p52 = scmp.ne.s32.totalorder %s38, %s39
    %p53 = scmp.eq.s32.totalorder %s17, 3
    %p54 = por %p52, %p53
    %p56 = scmp.ne.s32.totalorder %s39, %s55
    %p57 = scmp.eq.s32.totalorder %s17, 0
    %p58 = por %p56, %p57
    %s59 = ssub.s32 %s18, %s30
    %p60 = scmp.eq.s32.totalorder %s59, 0
    %s62 = sadd.s32 %s61, 1
    %s63 = scalar_select %p60, %s61, %s62
    %p66 = pneg %p60
    %p67 = scmp.eq.s32.totalorder %s11, 3
    %p68 = por %p66, %p67
    %p69 = scmp.ne.s32.totalorder %s61, %s64
    %p70 = scmp.eq.s32.totalorder %s11, 0
    %p71 = por %p69, %p70
    %p72 = scmp.ne.s32.totalorder %s61, %s64
    %p73 = scmp.eq.s32.totalorder %s16, 3
    %p74 = por %p72, %p73
    %p75 = scmp.ne.s32.totalorder %s64, %s65
    %p76 = scmp.eq.s32.totalorder %s16, 0
    %p77 = por %p75, %p76
    %p78 = scmp.ne.s32.totalorder %s64, %s65
    %p79 = scmp.eq.s32.totalorder %s17, 3
    %p80 = por %p78, %p79
    %p82 = scmp.ne.s32.totalorder %s65, %s81
    %p83 = scmp.eq.s32.totalorder %s17, 0
    %p84 = por %p82, %p83
    %s85 = ssub.s32 %s18, %s30
    %p86 = scmp.eq.s32.totalorder %s85, 0
    %s88 = sadd.s32 %s87, 1
    %s89 = scalar_select %p86, %s87, %s88
    %p92 = pneg %p86
    %p93 = scmp.eq.s32.totalorder %s11, 3
    %p94 = por %p92, %p93
    %p95 = scmp.ne.s32.totalorder %s87, %s90
    %p96 = scmp.eq.s32.totalorder %s11, 0
    %p97 = por %p95, %p96
    %p98 = scmp.ne.s32.totalorder %s87, %s90
    %p99 = scmp.eq.s32.totalorder %s16, 3
    %p100 = por %p98, %p99
    %p101 = scmp.ne.s32.totalorder %s90, %s91
    %p102 = scmp.eq.s32.totalorder %s16, 0
    %p103 = por %p101, %p102
    %p104 = scmp.ne.s32.totalorder %s90, %s91
    %p105 = scmp.eq.s32.totalorder %s17, 3
    %p106 = por %p104, %p105
    %p108 = scmp.ne.s32.totalorder %s91, %s107
    %p109 = scmp.eq.s32.totalorder %s17, 0
    %p110 = por %p108, %p109
    %s111 = ssub.s32 %s18, %s30
    %p112 = scmp.eq.s32.totalorder %s111, 0
    %s114 = sadd.s32 %s113, 1
    %s115 = scalar_select %p112, %s113, %s114
    %p118 = pneg %p112
    %p119 = scmp.eq.s32.totalorder %s11, 3
    %p120 = por %p118, %p119
    %p121 = scmp.ne.s32.totalorder %s113, %s116
    %p122 = scmp.eq.s32.totalorder %s11, 0
    %p123 = por %p121, %p122
    %p124 = scmp.ne.s32.totalorder %s113, %s116
    %p125 = scmp.eq.s32.totalorder %s16, 3
    %p126 = por %p124, %p125
    %p127 = scmp.ne.s32.totalorder %s116, %s117
    %p128 = scmp.eq.s32.totalorder %s16, 0
    %p129 = por %p127, %p128
    %p130 = scmp.ne.s32.totalorder %s116, %s117
    %p131 = scmp.eq.s32.totalorder %s17, 3
    %p132 = por %p130, %p131
    %p134 = scmp.ne.s32.totalorder %s117, %s133
    %p135 = scmp.eq.s32.totalorder %s17, 0
    %p136 = por %p134, %p135
    %s137 = ssub.s32 %s18, %s30
    %p138 = scmp.eq.s32.totalorder %s137, 0
    %s140 = sadd.s32 %s139, 1
    %s141 = scalar_select %p138, %s139, %s140
    %p144 = pneg %p138
    %p145 = scmp.eq.s32.totalorder %s11, 3
    %p146 = por %p144, %p145
    %p147 = scmp.ne.s32.totalorder %s139, %s142
    %p148 = scmp.eq.s32.totalorder %s11, 0
    %p149 = por %p147, %p148
    %p150 = scmp.ne.s32.totalorder %s139, %s142
    %p151 = scmp.eq.s32.totalorder %s16, 3
    %p152 = por %p150, %p151
    %p153 = scmp.ne.s32.totalorder %s142, %s143
    %p154 = scmp.eq.s32.totalorder %s16, 0
    %p155 = por %p153, %p154
    %p156 = scmp.ne.s32.totalorder %s142, %s143
    %p157 = scmp.eq.s32.totalorder %s17, 3
    %p158 = por %p156, %p157
    %p160 = scmp.ne.s32.totalorder %s143, %s159
    %p161 = scmp.eq.s32.totalorder %s17, 0
    %p162 = por %p160, %p161
    %s163 = ssub.s32 %s18, %s30
    %p164 = scmp.eq.s32.totalorder %s163, 0
    %s166 = sadd.s32 %s165, 1
    %s167 = scalar_select %p164, %s165, %s166
    %p170 = pneg %p164
    %p171 = scmp.eq.s32.totalorder %s11, 3
    %p172 = por %p170, %p171
    %p173 = scmp.ne.s32.totalorder %s165, %s168
    %p174 = scmp.eq.s32.totalorder %s11, 0
    %p175 = por %p173, %p174
    %p176 = scmp.ne.s32.totalorder %s165, %s168
    %p177 = scmp.eq.s32.totalorder %s16, 3
    %p178 = por %p176, %p177
    %p179 = scmp.ne.s32.totalorder %s168, %s169
    %p180 = scmp.eq.s32.totalorder %s16, 0
    %p181 = por %p179, %p180
    %p182 = scmp.ne.s32.totalorder %s168, %s169
    %p183 = scmp.eq.s32.totalorder %s17, 3
    %p184 = por %p182, %p183
    %p186 = scmp.ne.s32.totalorder %s169, %s185
    %p187 = scmp.eq.s32.totalorder %s17, 0
    %p188 = por %p186, %p187
    %p189 = scmp.le.s32.totalorder 1, %s11
    %p190 = scmp.lt.s32.totalorder %s11, 5
    %p191 = pnand %p189, %p190
    %p192 = pneg %p191
    // Predicated region
    $region9: #{two_tower_forward.1} parent=5 // pred_check
      _
    $region10: #{two_tower_forward.1} parent=5 // pred_check_branch
      %194 = sbr.rel (%p191) target = $region12
    $region11: #{two_tower_forward.1} parent=5 // pred_region
      %s195 = ssub.s32 %s11, 1
    $region12: #{two_tower_forward.1} parent=5 // pred_fallthru
      _
    %p196 = scmp.lt.s32.totalorder %s11, 4
    // Predicated region
    $region13: #{two_tower_forward.1} parent=5 // pred_check
      %p197 = pneg %p196
    $region14: #{two_tower_forward.1} parent=5 // pred_check_branch
      %199 = sbr.rel (%p197) target = $region16
    $region15: #{two_tower_forward.1} parent=5 // pred_region
      // Predicated region
      $region17: #{two_tower_forward.1} parent=15 // pred_check
        %p200 = pneg %p45
      $region18: #{two_tower_forward.1} parent=15 // pred_check_branch
        %202 = sbr.rel (%p200) target = $region20
      $region19: #{two_tower_forward.1} parent=15 // pred_region
        %s203 = smul.u32 8, %s19
        %p204 = scmp.lt.s32.totalorder %s18, 1
        %s205 = scalar_select %p204, %s18, 1
        %p206 = scmp.lt.s32.totalorder %s203, 15
        %s207 = scalar_select %p206, %s203, 15
        %s208 = smul.addr %s205, 16
        %s209 = sadd.s32 %s207, %s208
        %s210 = smul.addr %s209, 8
        %s211 = scalar_lea.vmem %s0, %s210
        %s212 = smul.u32 8, %s19
      $region20: #{two_tower_forward.1} parent=15 // pred_fallthru
        _
      // Predicated region
      $region21: #{two_tower_forward.1} parent=15 // pred_check
        %p213 = pneg %p71
      $region22: #{two_tower_forward.1} parent=15 // pred_check_branch
        %215 = sbr.rel (%p213) target = $region24
      $region23: #{two_tower_forward.1} parent=15 // pred_region
        %p216 = scmp.lt.s32.totalorder %s18, 1
        %s217 = scalar_select %p216, %s18, 1
        %s218 = smul.addr %s217, 4
        %s219 = smul.addr %s218, 8
        %s220 = scalar_lea.vmem %s1, %s219
      $region24: #{two_tower_forward.1} parent=15 // pred_fallthru
        _
      // Predicated region
      $region25: #{two_tower_forward.1} parent=15 // pred_check
        %p221 = pneg %p97
      $region26: #{two_tower_forward.1} parent=15 // pred_check_branch
        %223 = sbr.rel (%p221) target = $region28
      $region27: #{two_tower_forward.1} parent=15 // pred_region
        %p224 = scmp.lt.s32.totalorder %s18, 1
        %s225 = scalar_select %p224, %s18, 1
        %s226 = smul.addr %s225, 16
        %s227 = smul.addr %s226, 8
        %s228 = scalar_lea.vmem %s2, %s227
      $region28: #{two_tower_forward.1} parent=15 // pred_fallthru
        _
      // Predicated region
      $region29: #{two_tower_forward.1} parent=15 // pred_check
        %p229 = pneg %p123
      $region30: #{two_tower_forward.1} parent=15 // pred_check_branch
        %231 = sbr.rel (%p229) target = $region32
      $region31: #{two_tower_forward.1} parent=15 // pred_region
        %p232 = scmp.lt.s32.totalorder %s18, 1
        %s233 = scalar_select %p232, %s18, 1
        %s234 = scalar_lea.vmem %s3, %s233
      $region32: #{two_tower_forward.1} parent=15 // pred_fallthru
        _
      // Predicated region
      $region33: #{two_tower_forward.1} parent=15 // pred_check
        %p235 = pneg %p149
      $region34: #{two_tower_forward.1} parent=15 // pred_check_branch
        %237 = sbr.rel (%p235) target = $region36
      $region35: #{two_tower_forward.1} parent=15 // pred_region
        %p238 = scmp.lt.s32.totalorder %s18, 1
        %s239 = scalar_select %p238, %s18, 1
        %s240 = scalar_lea.vmem %s4, %s239
      $region36: #{two_tower_forward.1} parent=15 // pred_fallthru
        _
    $region16: #{two_tower_forward.1} parent=5 // pred_fallthru
      _
    %p241 = scmp.le.s32.totalorder 1, %s11
    %p242 = scmp.lt.s32.totalorder %s11, 5
    %p243 = pnand %p241, %p242
    %p244 = pneg %p243
    // Predicated region
    $region37: #{two_tower_forward.1} parent=5 // pred_check
      _
    $region38: #{two_tower_forward.1} parent=5 // pred_check_branch
      %246 = sbr.rel (%p243) target = $region40
    $region39: #{two_tower_forward.1} parent=5 // pred_region
      %s247 = ssub.s32 %s11, 1
      %s248 = smul.u32 8, %s21
      %p249 = scmp.lt.s32.totalorder %s20, 1
      %s250 = scalar_select %p249, %s20, 1
      %p251 = scmp.lt.s32.totalorder %s248, 15
      %s252 = scalar_select %p251, %s248, 15
      %s253 = smul.addr %s250, 16
      %s254 = sadd.s32 %s252, %s253
      %s255 = smul.addr %s254, 8
      %s256 = scalar_lea.vmem %s0, %s255
      %p257 = pneg %p51
      %p258 = pneg %p48
      %p259 = scmp.lt.s32.totalorder %s20, 1
      %s260 = scalar_select %p259, %s20, 1
      %s261 = smul.addr %s260, 4
      %s262 = smul.addr %s261, 8
      %s263 = scalar_lea.vmem %s1, %s262
      %p264 = pneg %p77
      %p265 = pneg %p74
      %p266 = scmp.lt.s32.totalorder %s20, 1
      %s267 = scalar_select %p266, %s20, 1
      %s268 = smul.addr %s267, 16
      %s269 = smul.addr %s268, 8
      %s270 = scalar_lea.vmem %s2, %s269
      %p271 = pneg %p103
      %p272 = pneg %p100
      %p273 = scmp.lt.s32.totalorder %s20, 1
      %s274 = scalar_select %p273, %s20, 1
      %s275 = scalar_lea.vmem %s3, %s274
      %p276 = pneg %p129
      %p277 = pneg %p126
      %p278 = scmp.lt.s32.totalorder %s20, 1
      %s279 = scalar_select %p278, %s20, 1
      %s280 = scalar_lea.vmem %s4, %s279
      %p281 = pneg %p155
      %p282 = pneg %p152
      %p283 = pneg %p181
      %p284 = pneg %p178
      %p285 = scmp.lt.s32.totalorder %s20, 1
      %s286 = scalar_select %p285, %s20, 1
      %s287 = smul.addr %s286, 8
      %s288 = scalar_lea.vmem %s5, %s287
      %s289 = smul.u32 8, %s21
      %p290 = scmp.lt.s32.totalorder %s20, 1
      %s291 = scalar_select %p290, %s20, 1
      %p292 = scmp.lt.s32.totalorder %s289, 15
      %s293 = scalar_select %p292, %s289, 15
      %s294 = smul.addr %s291, 16
      %s295 = sadd.s32 %s293, %s294
      %s296 = smul.addr %s295, 8
      %s297 = scalar_lea.vmem %s0, %s296
      %s298 = smul.u32 8, %s21
      %p299 = scmp.lt.s32.totalorder %s20, 1
      %s300 = scalar_select %p299, %s20, 1
      %s301 = smul.addr %s300, 4
      %s302 = smul.addr %s301, 8
      %s303 = scalar_lea.vmem %s1, %s302
      %p304 = scmp.lt.s32.totalorder %s20, 1
      %s305 = scalar_select %p304, %s20, 1
      %s306 = smul.addr %s305, 16
      %s307 = smul.addr %s306, 8
      %s308 = scalar_lea.vmem %s2, %s307
      %p309 = scmp.lt.s32.totalorder %s20, 1
      %s310 = scalar_select %p309, %s20, 1
      %s311 = scalar_lea.vmem %s3, %s310
      %p312 = scmp.lt.s32.totalorder %s20, 1
      %s313 = scalar_select %p312, %s20, 1
      %s314 = scalar_lea.vmem %s4, %s313
      %p315 = scmp.lt.s32.totalorder %s20, 1
      %s316 = scalar_select %p315, %s20, 1
      %s317 = smul.addr %s316, 8
      %s318 = scalar_lea.vmem %s5, %s317
      %p319 = scmp.eq.s32.totalorder %s21, 0
      // Predicated region
      $region41: #{two_tower_forward.1} parent=39 // pred_check
        %p320 = pneg %p319
      $region42: #{two_tower_forward.1} parent=39 // pred_check_branch
        %322 = sbr.rel (%p320) target = $region44
      $region43: #{two_tower_forward.1} parent=39 // pred_region
        %323 = vst [vmem:[%s318] sm:$0xff] 0.0
      $region44: #{two_tower_forward.1} parent=39 // pred_fallthru
        _
      %v324 = vld [vmem:[%s297] sm:$0xff]
      %v325 = vld [vmem:[%s297 + $0x8] sm:$0xff]
      %v326 = vld [vmem:[%s297 + $0x10] sm:$0xff]
      %v327 = vld [vmem:[%s297 + $0x18] sm:$0xff]
      %v328 = vld [vmem:[%s297 + $0x20] sm:$0xff]
      %v329 = vld [vmem:[%s297 + $0x28] sm:$0xff]
      %v330 = vld [vmem:[%s297 + $0x30] sm:$0xff]
      %v331 = vld [vmem:[%s297 + $0x38] sm:$0xff]
      %v332 = vld [vmem:[%s303] sm:$0xff]
      %v333 = vld [vmem:[%s303 + $0x8] sm:$0xff]
      %v334 = vld [vmem:[%s303 + $0x10] sm:$0xff]
      %v335 = vld [vmem:[%s303 + $0x18] sm:$0xff]
      %v336 = vld [vmem:[%s311] sm:$0x1]
      %v338 = vperm.slane %v336, 0
      %vm340 = vcmask 261120
      %v342 = vsel %vm340, %v324, 0
      %v345 = vsel %vm340, %v325, 0
      %v348 = vsel %vm340, %v326, 0
      %v351 = vsel %vm340, %v327, 0
      %v354 = vsel %vm340, %v328, 0
      %v357 = vsel %vm340, %v329, 0
      %v360 = vsel %vm340, %v330, 0
      %v363 = vsel %vm340, %v331, 0
      %365 = vmatpush.msra.mxu0 0.0
      %366 = vmatpush.msra.mxu0 0.0
      %367 = vmatpush.msra.mxu0 0.0
      %368 = vmatpush.msra.mxu0 0.0
      %369 = vmatpush.msra.mxu0 0.0
      %370 = vmatpush.msra.mxu0 0.0
      %371 = vmatpush.msra.mxu0 0.0
      %372 = vmatpush.msra.mxu0 0.0
      %373 = vmatpush.msra.mxu0 0.0
      %374 = vmatpush.msra.mxu0 0.0
      %375 = vmatpush.msra.mxu0 0.0
      %376 = vmatpush.msra.mxu0 0.0
      %377 = vmatpush.msra.mxu0 %v335
      %378 = vmatpush.msra.mxu0 %v334
      %379 = vmatpush.msra.mxu0 %v333
      %380 = vmatpush.msra.mxu0 %v332
      %381 = vmatmul.f32.gmra.mxu0 %v342
      %v382 = vpop.f32.mrf.mxu0
      %v383 = vadd.f32 %v338, %v382
      %384 = vmatmul.f32.gmra.mxu0 %v345
      %v385 = vpop.f32.mrf.mxu0
      %v386 = vadd.f32 %v338, %v385
      %387 = vmatmul.f32.gmra.mxu0 %v348
      %v388 = vpop.f32.mrf.mxu0
      %v389 = vadd.f32 %v338, %v388
      %390 = vmatmul.f32.gmra.mxu0 %v351
      %v391 = vpop.f32.mrf.mxu0
      %v392 = vadd.f32 %v338, %v391
      %393 = vmatmul.f32.gmra.mxu0 %v354
      %v394 = vpop.f32.mrf.mxu0
      %v395 = vadd.f32 %v338, %v394
      %396 = vmatmul.f32.gmra.mxu0 %v357
      %v397 = vpop.f32.mrf.mxu0
      %v398 = vadd.f32 %v338, %v397
      %399 = vmatmul.f32.gmra.mxu0 %v360
      %v400 = vpop.f32.mrf.mxu0
      %v401 = vadd.f32 %v338, %v400
      %402 = vmatmul.f32.gmra.mxu0 %v363
      %v403 = vpop.f32.mrf.mxu0
      %v404 = vadd.f32 %v338, %v403
      %405 = vdwg.mxu0
      %406 = vst [vmem:[#allocation2] sm:$0xff] %v383
      %407 = vst [vmem:[#allocation2 + $0x8] sm:$0xff] %v386
      %408 = vst [vmem:[#allocation2 + $0x10] sm:$0xff] %v389
      %409 = vst [vmem:[#allocation2 + $0x18] sm:$0xff] %v392
      %410 = vst [vmem:[#allocation2 + $0x20] sm:$0xff] %v395
      %411 = vst [vmem:[#allocation2 + $0x28] sm:$0xff] %v398
      %412 = vst [vmem:[#allocation2 + $0x30] sm:$0xff] %v401
      %413 = vst [vmem:[#allocation2 + $0x38] sm:$0xff] %v404
      %v414 = vld [vmem:[%s308] sm:$0xff]
      %v415 = vld [vmem:[%s308 + $0x8] sm:$0xff]
      %v416 = vld [vmem:[%s308 + $0x10] sm:$0xff]
      %v417 = vld [vmem:[%s308 + $0x18] sm:$0xff]
      %v418 = vld [vmem:[%s308 + $0x20] sm:$0xff]
      %v419 = vld [vmem:[%s308 + $0x28] sm:$0xff]
      %v420 = vld [vmem:[%s308 + $0x30] sm:$0xff]
      %v421 = vld [vmem:[%s308 + $0x38] sm:$0xff]
      %v422 = vld [vmem:[%s308 + $0x40] sm:$0xff]
      %v423 = vld [vmem:[%s308 + $0x48] sm:$0xff]
      %v424 = vld [vmem:[%s308 + $0x50] sm:$0xff]
      %v425 = vld [vmem:[%s308 + $0x58] sm:$0xff]
      %v426 = vld [vmem:[%s308 + $0x60] sm:$0xff]
      %v427 = vld [vmem:[%s308 + $0x68] sm:$0xff]
      %v428 = vld [vmem:[%s308 + $0x70] sm:$0xff]
      %v429 = vld [vmem:[%s308 + $0x78] sm:$0xff]
      %v430 = vld [vmem:[%s314] sm:$0x1]
      %s431 = smul.u32 %s20, 4
      %s432 = sadd.s32 %s431, 8
      %s433 = smul.u32 %s21, 8
      %v434 = vld [vmem:[%s318] sm:$0xff]
      %v435 = vld [vmem:[#allocation2] sm:$0xff]
      %v437 = vperm.slane %v430, 0
      %439 = vmatpush.msra.mxu0 %v429
      %440 = vmatpush.msra.mxu0 %v428
      %441 = vmatpush.msra.mxu0 %v427
      %442 = vmatpush.msra.mxu0 %v426
      %443 = vmatpush.msra.mxu0 %v425
      %444 = vmatpush.msra.mxu0 %v424
      %445 = vmatpush.msra.mxu0 %v423
      %446 = vmatpush.msra.mxu0 %v422
      %447 = vmatpush.msra.mxu0 %v421
      %448 = vmatpush.msra.mxu0 %v420
      %449 = vmatpush.msra.mxu0 %v419
      %450 = vmatpush.msra.mxu0 %v418
      %451 = vmatpush.msra.mxu0 %v417
      %452 = vmatpush.msra.mxu0 %v416
      %453 = vmatpush.msra.mxu0 %v415
      %454 = vmatpush.msra.mxu0 %v414
      %455 = vmatmul.f32.gmra.mxu0 %v434
      %v456 = vpop.f32.mrf.mxu0
      %v457 = vadd.f32 %v437, %v456
      %458 = vdwg.mxu0
      %v459 = vadd.f32 %v435, %v457
      %v460 = vxor.u32 %v459, 2147483648
      %v461 = vmul.f32 %v460, 1.442695
      %v462 = vpow.pop %v461
      %v463 = vadd.f32 %v462, 1.0
      %v464 = vrcp.pop %v463
      %v465 = vmul.f32 %v463, %v464
      %v466 = vsub.f32 1.0, %v465
      %v467 = vmul.f32 %v464, %v466
      %v468 = vadd.f32 %v464, %v467
      %vm469 = vweird.f32 %v463
      %vm470 = vweird.f32 %v464
      %vm471 = vmor %vm469, %vm470
      %v472 = vsel %vm471, %v464, %v468
      %v473 = vand.u32 2147483647, %v463
      %vm474 = vcmp.eq.f32.partialorder %v473, 8.507059e+37
      %v475 = vand.u32 %v463, 2147483648
      %v476 = vor.u32 1.1754944e-38, %v475
      %v477 = vsel %vm474, %v476, %v472
      %v478 = vmul.f32 1.0, %v477
      %480 = vrot.lane.b32.xlu0 %v457, 32
      %v481 = vpop.permute.xlu0 %480
      %v483 = vmul.f32 %v478, %v481
      %485 = vrot.lane.b32.xlu0 %v483, 96
      %v486 = vpop.permute.xlu0 %485
      %v488 = vadd.f32 %v435, %v486
      %v489 = vtanh.pop %v488
      %491 = vrot.lane.b32.xlu0 %v478, 96
      %v492 = vpop.permute.xlu0 %491
      %v494 = vsub.f32 1.0, %v492
      %496 = vrot.lane.b32.xlu0 %v489, 32
      %v497 = vpop.permute.xlu0 %496
      %v499 = vmul.f32 %v494, %v497
      %501 = vrot.lane.b32.xlu0 %v434, 32
      %v502 = vpop.permute.xlu0 %501
      %v504 = vmul.f32 %v492, %v502
      %v505 = vadd.f32 %v499, %v504
      %p506 = scmp.lt.s32.totalorder %s433, %s432
      %s507 = scalar_select %p506, 1, 0
      %s508 = scvt.s32.f32 %s507
      %v509 = vstv %s508
      %v510 = vmul.f32 %v509, %v505
      %s511 = ssub.f32 1.0, %s508
      %v512 = vstv %s511
      %v513 = vmul.f32 %v512, %v434
      %515 = vrot.lane.b32.xlu0 %v513, 32
      %v516 = vpop.permute.xlu0 %515
      %v518 = vadd.f32 %v510, %v516
      %s519 = scalar_lea.vmem [#allocation2], 8
      %v520 = vld [vmem:[%s519] sm:$0xff]
      %522 = vrot.lane.b32.xlu0 %v518, 96
      %v523 = vpop.permute.xlu0 %522
      %525 = vmatpush.msra.mxu0 %v429
      %526 = vmatpush.msra.mxu0 %v428
      %527 = vmatpush.msra.mxu0 %v427
      %528 = vmatpush.msra.mxu0 %v426
      %529 = vmatpush.msra.mxu0 %v425
      %530 = vmatpush.msra.mxu0 %v424
      %531 = vmatpush.msra.mxu0 %v423
      %532 = vmatpush.msra.mxu0 %v422
      %533 = vmatpush.msra.mxu0 %v421
      %534 = vmatpush.msra.mxu0 %v420
      %535 = vmatpush.msra.mxu0 %v419
      %536 = vmatpush.msra.mxu0 %v418
      %537 = vmatpush.msra.mxu0 %v417
      %538 = vmatpush.msra.mxu0 %v416
      %539 = vmatpush.msra.mxu0 %v415
      %540 = vmatpush.msra.mxu0 %v414
      %541 = vmatmul.f32.gmra.mxu0 %v523
      %v542 = vpop.f32.mrf.mxu0
      %v543 = vadd.f32 %v437, %v542
      %544 = vdwg.mxu0
      %v545 = vadd.f32 %v520, %v543
      %v546 = vxor.u32 %v545, 2147483648
      %v547 = vmul.f32 %v546, 1.442695
      %v548 = vpow.pop %v547
      %v549 = vadd.f32 %v548, 1.0
      %v550 = vrcp.pop %v549
      %v551 = vmul.f32 %v549, %v550
      %v552 = vsub.f32 1.0, %v551
      %v553 = vmul.f32 %v550, %v552
      %v554 = vadd.f32 %v550, %v553
      %vm555 = vweird.f32 %v549
      %vm556 = vweird.f32 %v550
      %vm557 = vmor %vm555, %vm556
      %v558 = vsel %vm557, %v550, %v554
      %v559 = vand.u32 2147483647, %v549
      %vm560 = vcmp.eq.f32.partialorder %v559, 8.507059e+37
      %v561 = vand.u32 %v549, 2147483648
      %v562 = vor.u32 1.1754944e-38, %v561
      %v563 = vsel %vm560, %v562, %v558
      %v564 = vmul.f32 1.0, %v563
      %566 = vrot.lane.b32.xlu0 %v543, 32
      %v567 = vpop.permute.xlu0 %566
      %v569 = vmul.f32 %v564, %v567
      %571 = vrot.lane.b32.xlu0 %v569, 96
      %v572 = vpop.permute.xlu0 %571
      %v574 = vadd.f32 %v520, %v572
      %v575 = vtanh.pop %v574
      %577 = vrot.lane.b32.xlu0 %v564, 96
      %v578 = vpop.permute.xlu0 %577
      %v580 = vsub.f32 1.0, %v578
      %582 = vrot.lane.b32.xlu0 %v575, 32
      %v583 = vpop.permute.xlu0 %582
      %v585 = vmul.f32 %v580, %v583
      %v586 = vmul.f32 %v578, %v518
      %v587 = vadd.f32 %v585, %v586
      %s588 = sadd.s32 %s433, 1
      %p589 = scmp.lt.s32.totalorder %s588, %s432
      %s590 = scalar_select %p589, 1, 0
      %s591 = scvt.s32.f32 %s590
      %v592 = vstv %s591
      %v593 = vmul.f32 %v592, %v587
      %s594 = ssub.f32 1.0, %s591
      %v595 = vstv %s594
      %v596 = vmul.f32 %v595, %v518
      %v597 = vadd.f32 %v593, %v596
      %s598 = scalar_lea.vmem [#allocation2], 16
      %v599 = vld [vmem:[%s598] sm:$0xff]
      %601 = vrot.lane.b32.xlu0 %v597, 96
      %v602 = vpop.permute.xlu0 %601
      %604 = vmatpush.msra.mxu0 %v429
      %605 = vmatpush.msra.mxu0 %v428
      %606 = vmatpush.msra.mxu0 %v427
      %607 = vmatpush.msra.mxu0 %v426
      %608 = vmatpush.msra.mxu0 %v425
      %609 = vmatpush.msra.mxu0 %v424
      %610 = vmatpush.msra.mxu0 %v423
      %611 = vmatpush.msra.mxu0 %v422
      %612 = vmatpush.msra.mxu0 %v421
      %613 = vmatpush.msra.mxu0 %v420
      %614 = vmatpush.msra.mxu0 %v419
      %615 = vmatpush.msra.mxu0 %v418
      %616 = vmatpush.msra.mxu0 %v417
      %617 = vmatpush.msra.mxu0 %v416
      %618 = vmatpush.msra.mxu0 %v415
      %619 = vmatpush.msra.mxu0 %v414
      %620 = vmatmul.f32.gmra.mxu0 %v602
      %v621 = vpop.f32.mrf.mxu0
      %v622 = vadd.f32 %v437, %v621
      %623 = vdwg.mxu0
      %v624 = vadd.f32 %v599, %v622
      %v625 = vxor.u32 %v624, 2147483648
      %v626 = vmul.f32 %v625, 1.442695
      %v627 = vpow.pop %v626
      %v628 = vadd.f32 %v627, 1.0
      %v629 = vrcp.pop %v628
      %v630 = vmul.f32 %v628, %v629
      %v631 = vsub.f32 1.0, %v630
      %v632 = vmul.f32 %v629, %v631
      %v633 = vadd.f32 %v629, %v632
      %vm634 = vweird.f32 %v628
      %vm635 = vweird.f32 %v629
      %vm636 = vmor %vm634, %vm635
      %v637 = vsel %vm636, %v629, %v633
      %v638 = vand.u32 2147483647, %v628
      %vm639 = vcmp.eq.f32.partialorder %v638, 8.507059e+37
      %v640 = vand.u32 %v628, 2147483648
      %v641 = vor.u32 1.1754944e-38, %v640
      %v642 = vsel %vm639, %v641, %v637
      %v643 = vmul.f32 1.0, %v642
      %645 = vrot.lane.b32.xlu0 %v622, 32
      %v646 = vpop.permute.xlu0 %645
      %v648 = vmul.f32 %v643, %v646
      %650 = vrot.lane.b32.xlu0 %v648, 96
      %v651 = vpop.permute.xlu0 %650
      %v653 = vadd.f32 %v599, %v651
      %v654 = vtanh.pop %v653
      %656 = vrot.lane.b32.xlu0 %v643, 96
      %v657 = vpop.permute.xlu0 %656
      %v659 = vsub.f32 1.0, %v657
      %661 = vrot.lane.b32.xlu0 %v654, 32
      %v662 = vpop.permute.xlu0 %661
      %v664 = vmul.f32 %v659, %v662
      %v665 = vmul.f32 %v657, %v597
      %v666 = vadd.f32 %v664, %v665
      %s667 = sadd.s32 %s433, 2
      %p668 = scmp.lt.s32.totalorder %s667, %s432
      %s669 = scalar_select %p668, 1, 0
      %s670 = scvt.s32.f32 %s669
      %v671 = vstv %s670
      %v672 = vmul.f32 %v671, %v666
      %s673 = ssub.f32 1.0, %s670
      %v674 = vstv %s673
      %v675 = vmul.f32 %v674, %v597
      %v676 = vadd.f32 %v672, %v675
      %s677 = scalar_lea.vmem [#allocation2], 24
      %v678 = vld [vmem:[%s677] sm:$0xff]
      %680 = vrot.lane.b32.xlu0 %v676, 96
      %v681 = vpop.permute.xlu0 %680
      %683 = vmatpush.msra.mxu0 %v429
      %684 = vmatpush.msra.mxu0 %v428
      %685 = vmatpush.msra.mxu0 %v427
      %686 = vmatpush.msra.mxu0 %v426
      %687 = vmatpush.msra.mxu0 %v425
      %688 = vmatpush.msra.mxu0 %v424
      %689 = vmatpush.msra.mxu0 %v423
      %690 = vmatpush.msra.mxu0 %v422
      %691 = vmatpush.msra.mxu0 %v421
      %692 = vmatpush.msra.mxu0 %v420
      %693 = vmatpush.msra.mxu0 %v419
      %694 = vmatpush.msra.mxu0 %v418
      %695 = vmatpush.msra.mxu0 %v417
      %696 = vmatpush.msra.mxu0 %v416
      %697 = vmatpush.msra.mxu0 %v415
      %698 = vmatpush.msra.mxu0 %v414
      %699 = vmatmul.f32.gmra.mxu0 %v681
      %v700 = vpop.f32.mrf.mxu0
      %v701 = vadd.f32 %v437, %v700
      %702 = vdwg.mxu0
      %v703 = vadd.f32 %v678, %v701
      %v704 = vxor.u32 %v703, 2147483648
      %v705 = vmul.f32 %v704, 1.442695
      %v706 = vpow.pop %v705
      %v707 = vadd.f32 %v706, 1.0
      %v708 = vrcp.pop %v707
      %v709 = vmul.f32 %v707, %v708
      %v710 = vsub.f32 1.0, %v709
      %v711 = vmul.f32 %v708, %v710
      %v712 = vadd.f32 %v708, %v711
      %vm713 = vweird.f32 %v707
      %vm714 = vweird.f32 %v708
      %vm715 = vmor %vm713, %vm714
      %v716 = vsel %vm715, %v708, %v712
      %v717 = vand.u32 2147483647, %v707
      %vm718 = vcmp.eq.f32.partialorder %v717, 8.507059e+37
      %v719 = vand.u32 %v707, 2147483648
      %v720 = vor.u32 1.1754944e-38, %v719
      %v721 = vsel %vm718, %v720, %v716
      %v722 = vmul.f32 1.0, %v721
      %724 = vrot.lane.b32.xlu0 %v701, 32
      %v725 = vpop.permute.xlu0 %724
      %v727 = vmul.f32 %v722, %v725
      %729 = vrot.lane.b32.xlu0 %v727, 96
      %v730 = vpop.permute.xlu0 %729
      %v732 = vadd.f32 %v678, %v730
      %v733 = vtanh.pop %v732
      %735 = vrot.lane.b32.xlu0 %v722, 96
      %v736 = vpop.permute.xlu0 %735
      %v738 = vsub.f32 1.0, %v736
      %740 = vrot.lane.b32.xlu0 %v733, 32
      %v741 = vpop.permute.xlu0 %740
      %v743 = vmul.f32 %v738, %v741
      %v744 = vmul.f32 %v736, %v676
      %v745 = vadd.f32 %v743, %v744
      %s746 = sadd.s32 %s433, 3
      %p747 = scmp.lt.s32.totalorder %s746, %s432
      %s748 = scalar_select %p747, 1, 0
      %s749 = scvt.s32.f32 %s748
      %v750 = vstv %s749
      %v751 = vmul.f32 %v750, %v745
      %s752 = ssub.f32 1.0, %s749
      %v753 = vstv %s752
      %v754 = vmul.f32 %v753, %v676
      %v755 = vadd.f32 %v751, %v754
      %s756 = scalar_lea.vmem [#allocation2], 32
      %v757 = vld [vmem:[%s756] sm:$0xff]
      %759 = vrot.lane.b32.xlu0 %v755, 96
      %v760 = vpop.permute.xlu0 %759
      %762 = vmatpush.msra.mxu0 %v429
      %763 = vmatpush.msra.mxu0 %v428
      %764 = vmatpush.msra.mxu0 %v427
      %765 = vmatpush.msra.mxu0 %v426
      %766 = vmatpush.msra.mxu0 %v425
      %767 = vmatpush.msra.mxu0 %v424
      %768 = vmatpush.msra.mxu0 %v423
      %769 = vmatpush.msra.mxu0 %v422
      %770 = vmatpush.msra.mxu0 %v421
      %771 = vmatpush.msra.mxu0 %v420
      %772 = vmatpush.msra.mxu0 %v419
      %773 = vmatpush.msra.mxu0 %v418
      %774 = vmatpush.msra.mxu0 %v417
      %775 = vmatpush.msra.mxu0 %v416
      %776 = vmatpush.msra.mxu0 %v415
      %777 = vmatpush.msra.mxu0 %v414
      %778 = vmatmul.f32.gmra.mxu0 %v760
      %v779 = vpop.f32.mrf.mxu0
      %v780 = vadd.f32 %v437, %v779
      %781 = vdwg.mxu0
      %v782 = vadd.f32 %v757, %v780
      %v783 = vxor.u32 %v782, 2147483648
      %v784 = vmul.f32 %v783, 1.442695
      %v785 = vpow.pop %v784
      %v786 = vadd.f32 %v785, 1.0
      %v787 = vrcp.pop %v786
      %v788 = vmul.f32 %v786, %v787
      %v789 = vsub.f32 1.0, %v788
      %v790 = vmul.f32 %v787, %v789
      %v791 = vadd.f32 %v787, %v790
      %vm792 = vweird.f32 %v786
      %vm793 = vweird.f32 %v787
      %vm794 = vmor %vm792, %vm793
      %v795 = vsel %vm794, %v787, %v791
      %v796 = vand.u32 2147483647, %v786
      %vm797 = vcmp.eq.f32.partialorder %v796, 8.507059e+37
      %v798 = vand.u32 %v786, 2147483648
      %v799 = vor.u32 1.1754944e-38, %v798
      %v800 = vsel %vm797, %v799, %v795
      %v801 = vmul.f32 1.0, %v800
      %803 = vrot.lane.b32.xlu0 %v780, 32
      %v804 = vpop.permute.xlu0 %803
      %v806 = vmul.f32 %v801, %v804
      %808 = vrot.lane.b32.xlu0 %v806, 96
      %v809 = vpop.permute.xlu0 %808
      %v811 = vadd.f32 %v757, %v809
      %v812 = vtanh.pop %v811
      %814 = vrot.lane.b32.xlu0 %v801, 96
      %v815 = vpop.permute.xlu0 %814
      %v817 = vsub.f32 1.0, %v815
      %819 = vrot.lane.b32.xlu0 %v812, 32
      %v820 = vpop.permute.xlu0 %819
      %v822 = vmul.f32 %v817, %v820
      %v823 = vmul.f32 %v815, %v755
      %v824 = vadd.f32 %v822, %v823
      %s825 = sadd.s32 %s433, 4
      %p826 = scmp.lt.s32.totalorder %s825, %s432
      %s827 = scalar_select %p826, 1, 0
      %s828 = scvt.s32.f32 %s827
      %v829 = vstv %s828
      %v830 = vmul.f32 %v829, %v824
      %s831 = ssub.f32 1.0, %s828
      %v832 = vstv %s831
      %v833 = vmul.f32 %v832, %v755
      %v834 = vadd.f32 %v830, %v833
      %s835 = scalar_lea.vmem [#allocation2], 40
      %v836 = vld [vmem:[%s835] sm:$0xff]
      %838 = vrot.lane.b32.xlu0 %v834, 96
      %v839 = vpop.permute.xlu0 %838
      %841 = vmatpush.msra.mxu0 %v429
      %842 = vmatpush.msra.mxu0 %v428
      %843 = vmatpush.msra.mxu0 %v427
      %844 = vmatpush.msra.mxu0 %v426
      %845 = vmatpush.msra.mxu0 %v425
      %846 = vmatpush.msra.mxu0 %v424
      %847 = vmatpush.msra.mxu0 %v423
      %848 = vmatpush.msra.mxu0 %v422
      %849 = vmatpush.msra.mxu0 %v421
      %850 = vmatpush.msra.mxu0 %v420
      %851 = vmatpush.msra.mxu0 %v419
      %852 = vmatpush.msra.mxu0 %v418
      %853 = vmatpush.msra.mxu0 %v417
      %854 = vmatpush.msra.mxu0 %v416
      %855 = vmatpush.msra.mxu0 %v415
      %856 = vmatpush.msra.mxu0 %v414
      %857 = vmatmul.f32.gmra.mxu0 %v839
      %v858 = vpop.f32.mrf.mxu0
      %v859 = vadd.f32 %v437, %v858
      %860 = vdwg.mxu0
      %v861 = vadd.f32 %v836, %v859
      %v862 = vxor.u32 %v861, 2147483648
      %v863 = vmul.f32 %v862, 1.442695
      %v864 = vpow.pop %v863
      %v865 = vadd.f32 %v864, 1.0
      %v866 = vrcp.pop %v865
      %v867 = vmul.f32 %v865, %v866
      %v868 = vsub.f32 1.0, %v867
      %v869 = vmul.f32 %v866, %v868
      %v870 = vadd.f32 %v866, %v869
      %vm871 = vweird.f32 %v865
      %vm872 = vweird.f32 %v866
      %vm873 = vmor %vm871, %vm872
      %v874 = vsel %vm873, %v866, %v870
      %v875 = vand.u32 2147483647, %v865
      %vm876 = vcmp.eq.f32.partialorder %v875, 8.507059e+37
      %v877 = vand.u32 %v865, 2147483648
      %v878 = vor.u32 1.1754944e-38, %v877
      %v879 = vsel %vm876, %v878, %v874
      %v880 = vmul.f32 1.0, %v879
      %882 = vrot.lane.b32.xlu0 %v859, 32
      %v883 = vpop.permute.xlu0 %882
      %v885 = vmul.f32 %v880, %v883
      %887 = vrot.lane.b32.xlu0 %v885, 96
      %v888 = vpop.permute.xlu0 %887
      %v890 = vadd.f32 %v836, %v888
      %v891 = vtanh.pop %v890
      %893 = vrot.lane.b32.xlu0 %v880, 96
      %v894 = vpop.permute.xlu0 %893
      %v896 = vsub.f32 1.0, %v894
      %898 = vrot.lane.b32.xlu0 %v891, 32
      %v899 = vpop.permute.xlu0 %898
      %v901 = vmul.f32 %v896, %v899
      %v902 = vmul.f32 %v894, %v834
      %v903 = vadd.f32 %v901, %v902
      %s904 = sadd.s32 %s433, 5
      %p905 = scmp.lt.s32.totalorder %s904, %s432
      %s906 = scalar_select %p905, 1, 0
      %s907 = scvt.s32.f32 %s906
      %v908 = vstv %s907
      %v909 = vmul.f32 %v908, %v903
      %s910 = ssub.f32 1.0, %s907
      %v911 = vstv %s910
      %v912 = vmul.f32 %v911, %v834
      %v913 = vadd.f32 %v909, %v912
      %s914 = scalar_lea.vmem [#allocation2], 48
      %v915 = vld [vmem:[%s914] sm:$0xff]
      %917 = vrot.lane.b32.xlu0 %v913, 96
      %v918 = vpop.permute.xlu0 %917
      %920 = vmatpush.msra.mxu0 %v429
      %921 = vmatpush.msra.mxu0 %v428
      %922 = vmatpush.msra.mxu0 %v427
      %923 = vmatpush.msra.mxu0 %v426
      %924 = vmatpush.msra.mxu0 %v425
      %925 = vmatpush.msra.mxu0 %v424
      %926 = vmatpush.msra.mxu0 %v423
      %927 = vmatpush.msra.mxu0 %v422
      %928 = vmatpush.msra.mxu0 %v421
      %929 = vmatpush.msra.mxu0 %v420
      %930 = vmatpush.msra.mxu0 %v419
      %931 = vmatpush.msra.mxu0 %v418
      %932 = vmatpush.msra.mxu0 %v417
      %933 = vmatpush.msra.mxu0 %v416
      %934 = vmatpush.msra.mxu0 %v415
      %935 = vmatpush.msra.mxu0 %v414
      %936 = vmatmul.f32.gmra.mxu0 %v918
      %v937 = vpop.f32.mrf.mxu0
      %v938 = vadd.f32 %v437, %v937
      %939 = vdwg.mxu0
      %v940 = vadd.f32 %v915, %v938
      %v941 = vxor.u32 %v940, 2147483648
      %v942 = vmul.f32 %v941, 1.442695
      %v943 = vpow.pop %v942
      %v944 = vadd.f32 %v943, 1.0
      %v945 = vrcp.pop %v944
      %v946 = vmul.f32 %v944, %v945
      %v947 = vsub.f32 1.0, %v946
      %v948 = vmul.f32 %v945, %v947
      %v949 = vadd.f32 %v945, %v948
      %vm950 = vweird.f32 %v944
      %vm951 = vweird.f32 %v945
      %vm952 = vmor %vm950, %vm951
      %v953 = vsel %vm952, %v945, %v949
      %v954 = vand.u32 2147483647, %v944
      %vm955 = vcmp.eq.f32.partialorder %v954, 8.507059e+37
      %v956 = vand.u32 %v944, 2147483648
      %v957 = vor.u32 1.1754944e-38, %v956
      %v958 = vsel %vm955, %v957, %v953
      %v959 = vmul.f32 1.0, %v958
      %961 = vrot.lane.b32.xlu0 %v938, 32
      %v962 = vpop.permute.xlu0 %961
      %v964 = vmul.f32 %v959, %v962
      %966 = vrot.lane.b32.xlu0 %v964, 96
      %v967 = vpop.permute.xlu0 %966
      %v969 = vadd.f32 %v915, %v967
      %v970 = vtanh.pop %v969
      %972 = vrot.lane.b32.xlu0 %v959, 96
      %v973 = vpop.permute.xlu0 %972
      %v975 = vsub.f32 1.0, %v973
      %977 = vrot.lane.b32.xlu0 %v970, 32
      %v978 = vpop.permute.xlu0 %977
      %v980 = vmul.f32 %v975, %v978
      %v981 = vmul.f32 %v973, %v913
      %v982 = vadd.f32 %v980, %v981
      %s983 = sadd.s32 %s433, 6
      %p984 = scmp.lt.s32.totalorder %s983, %s432
      %s985 = scalar_select %p984, 1, 0
      %s986 = scvt.s32.f32 %s985
      %v987 = vstv %s986
      %v988 = vmul.f32 %v987, %v982
      %s989 = ssub.f32 1.0, %s986
      %v990 = vstv %s989
      %v991 = vmul.f32 %v990, %v913
      %v992 = vadd.f32 %v988, %v991
      %s993 = scalar_lea.vmem [#allocation2], 56
      %v994 = vld [vmem:[%s993] sm:$0xff]
      %996 = vrot.lane.b32.xlu0 %v992, 96
      %v997 = vpop.permute.xlu0 %996
      %999 = vmatpush.msra.mxu0 %v429
      %1000 = vmatpush.msra.mxu0 %v428
      %1001 = vmatpush.msra.mxu0 %v427
      %1002 = vmatpush.msra.mxu0 %v426
      %1003 = vmatpush.msra.mxu0 %v425
      %1004 = vmatpush.msra.mxu0 %v424
      %1005 = vmatpush.msra.mxu0 %v423
      %1006 = vmatpush.msra.mxu0 %v422
      %1007 = vmatpush.msra.mxu0 %v421
      %1008 = vmatpush.msra.mxu0 %v420
      %1009 = vmatpush.msra.mxu0 %v419
      %1010 = vmatpush.msra.mxu0 %v418
      %1011 = vmatpush.msra.mxu0 %v417
      %1012 = vmatpush.msra.mxu0 %v416
      %1013 = vmatpush.msra.mxu0 %v415
      %1014 = vmatpush.msra.mxu0 %v414
      %1015 = vmatmul.f32.gmra.mxu0 %v997
      %v1016 = vpop.f32.mrf.mxu0
      %v1017 = vadd.f32 %v437, %v1016
      %1018 = vdwg.mxu0
      %v1019 = vadd.f32 %v994, %v1017
      %v1020 = vxor.u32 %v1019, 2147483648
      %v1021 = vmul.f32 %v1020, 1.442695
      %v1022 = vpow.pop %v1021
      %v1023 = vadd.f32 %v1022, 1.0
      %v1024 = vrcp.pop %v1023
      %v1025 = vmul.f32 %v1023, %v1024
      %v1026 = vsub.f32 1.0, %v1025
      %v1027 = vmul.f32 %v1024, %v1026
      %v1028 = vadd.f32 %v1024, %v1027
      %vm1029 = vweird.f32 %v1023
      %vm1030 = vweird.f32 %v1024
      %vm1031 = vmor %vm1029, %vm1030
      %v1032 = vsel %vm1031, %v1024, %v1028
      %v1033 = vand.u32 2147483647, %v1023
      %vm1034 = vcmp.eq.f32.partialorder %v1033, 8.507059e+37
      %v1035 = vand.u32 %v1023, 2147483648
      %v1036 = vor.u32 1.1754944e-38, %v1035
      %v1037 = vsel %vm1034, %v1036, %v1032
      %v1038 = vmul.f32 1.0, %v1037
      %1040 = vrot.lane.b32.xlu0 %v1017, 32
      %v1041 = vpop.permute.xlu0 %1040
      %v1043 = vmul.f32 %v1038, %v1041
      %1045 = vrot.lane.b32.xlu0 %v1043, 96
      %v1046 = vpop.permute.xlu0 %1045
      %v1048 = vadd.f32 %v994, %v1046
      %v1049 = vtanh.pop %v1048
      %1051 = vrot.lane.b32.xlu0 %v1038, 96
      %v1052 = vpop.permute.xlu0 %1051
      %v1054 = vsub.f32 1.0, %v1052
      %1056 = vrot.lane.b32.xlu0 %v1049, 32
      %v1057 = vpop.permute.xlu0 %1056
      %v1059 = vmul.f32 %v1054, %v1057
      %v1060 = vmul.f32 %v1052, %v992
      %v1061 = vadd.f32 %v1059, %v1060
      %s1062 = sadd.s32 %s433, 7
      %p1063 = scmp.lt.s32.totalorder %s1062, %s432
      %s1064 = scalar_select %p1063, 1, 0
      %s1065 = scvt.s32.f32 %s1064
      %v1066 = vstv %s1065
      %v1067 = vmul.f32 %v1066, %v1061
      %s1068 = ssub.f32 1.0, %s1065
      %v1069 = vstv %s1068
      %v1070 = vmul.f32 %v1069, %v992
      %v1071 = vadd.f32 %v1067, %v1070
      %1073 = vrot.lane.b32.xlu0 %v1071, 96
      %v1074 = vpop.permute.xlu0 %1073
      %1076 = vst [vmem:[%s318] sm:$0xff] %v1074
      %p1077 = scmp.lt.s32.totalorder %s20, 1
      %s1078 = scalar_select %p1077, %s20, 1
      %s1079 = smul.addr %s1078, 8
      %s1080 = scalar_lea.vmem %s5, %s1079
      // Predicated region
      $region45: #{two_tower_forward.1} parent=39 // pred_check
        %p1081 = pneg %p178
      $region46: #{two_tower_forward.1} parent=39 // pred_check_branch
        %1083 = sbr.rel (%p1081) target = $region48
      $region47: #{two_tower_forward.1} parent=39 // pred_region
        _
      $region48: #{two_tower_forward.1} parent=39 // pred_fallthru
        _
    $region40: #{two_tower_forward.1} parent=5 // pred_fallthru
      _
    %p1084 = scmp.le.s32.totalorder 2, %s11
    // Predicated region
    $region49: #{two_tower_forward.1} parent=5 // pred_check
      %p1085 = pneg %p1084
    $region50: #{two_tower_forward.1} parent=5 // pred_check_branch
      %1087 = sbr.rel (%p1085) target = $region52
    $region51: #{two_tower_forward.1} parent=5 // pred_region
      %s1088 = ssub.s32 %s11, 2
      // Predicated region
      $region53: #{two_tower_forward.1} parent=51 // pred_check
        %p1089 = pneg %p184
      $region54: #{two_tower_forward.1} parent=51 // pred_check_branch
        %1091 = sbr.rel (%p1089) target = $region56
      $region55: #{two_tower_forward.1} parent=51 // pred_region
        %p1092 = scmp.lt.s32.totalorder %s22, 1
        %s1093 = scalar_select %p1092, %s22, 1
        %s1094 = smul.addr %s1093, 8
        %s1095 = scalar_lea.vmem %s5, %s1094
      $region56: #{two_tower_forward.1} parent=51 // pred_fallthru
        _
    $region52: #{two_tower_forward.1} parent=5 // pred_fallthru
      _
  $region6: #{two_tower_forward.1} parent=0 // loop_footer
    %s15 = sadd.s32 1, %s11
  $region7: #{two_tower_forward.1} parent=0 // loop_footer_branch
    %10 = sbr.rel target = $region3
  $region8: #{two_tower_forward.1} parent=0 // loop_exit
    _

</llo_original>
